<compile_context>
chip_gen: v6e
topology: v6e:2x2x1
jax: 0.10.0
libtpu: 0.0.40
codegen_flags: <defaults>
</compile_context>

<pallas_src>
import functools
import math

import jax
import jax.numpy as jnp
from jax import lax
from jax.experimental import pallas as pl
from jax.experimental.pallas import tpu as pltpu


# ----------------------------------------------------------------------------
# Kernel helpers
# ----------------------------------------------------------------------------

def _layernorm(h, g, b, eps):
    # h: [..., H] float32; g, b broadcast over leading dims.
    mean = jnp.mean(h, axis=-1, keepdims=True)
    c = h - mean
    var = jnp.mean(c * c, axis=-1, keepdims=True)
    return c * lax.rsqrt(var + eps) * g + b


# ----------------------------------------------------------------------------
# Fused layer-stack kernel: one grid step == one transformer layer on one batch tile
# ----------------------------------------------------------------------------

def _stack_kernel(emb_ref, mask_ref, eg_ref, eb_ref,
                  wqkv_ref, bqkv_ref, wo_ref, bo_ref, ag_ref, ab_ref,
                  w1_ref, b1_ref, w2_ref, b2_ref, fg_ref, fb_ref,
                  out_ref, *, num_heads, eps, approx_gelu):
    layer = pl.program_id(1)
    bt, S, H = out_ref.shape
    M = bt * S                               # batch folded into the MXU M dimension
    dh = H // num_heads
    scale = 1.0 / math.sqrt(dh)

    # FrameEmbeddings: LayerNorm(frame_feat + pos_emb) fused into the first layer step.
    @pl.when(layer == 0)
    def _():
        out_ref[...] = _layernorm(emb_ref[...], eg_ref[...], eb_ref[...], eps)

    x3 = out_ref[...]                        # [bt, S, H] f32, residual / layer input
    x2 = x3.reshape(M, H)
    xb = x2.astype(jnp.bfloat16)

    # ---------------- Self-attention ----------------
    # Fused QKV projection: one [M,H] x [H,3H] bf16 matmul, f32 accumulation.
    qkv = jnp.dot(xb, wqkv_ref[0], preferred_element_type=jnp.float32) + bqkv_ref[0]
    # Single bf16 cast pass for the whole [M,3H] tensor (per-head slices are bf16 views).
    qkv3 = qkv.astype(jnp.bfloat16).reshape(bt, S, 3 * H)
    mask = mask_ref[...]                     # [bt, 1, S] additive mask, hoisted (f32)

    wo = wo_ref[0]                           # [H, H] bf16, loaded once
    attn = jnp.zeros((M, H), jnp.float32)    # partial output-projection accumulator
    for h in range(num_heads):               # static unroll over heads
        q_h = qkv3[:, :, h * dh:(h + 1) * dh]                    # [bt,S,dh] bf16
        k_h = qkv3[:, :, H + h * dh:H + (h + 1) * dh]
        v_h = qkv3[:, :, 2 * H + h * dh:2 * H + (h + 1) * dh]
        # NT contraction over dh (no explicit transpose through the XLU).
        s = jnp.einsum('bqd,bkd->bqk', q_h, k_h,
                       preferred_element_type=jnp.float32) * scale + mask    # [bt,S,S]
        s = s - jnp.max(s, axis=-1, keepdims=True)
        p = jnp.exp(s)
        p = p * pl.reciprocal(jnp.sum(p, axis=-1, keepdims=True), approx=True)
        c_h = jnp.einsum('bqk,bkd->bqd', p.astype(jnp.bfloat16), v_h,
                         preferred_element_type=jnp.float32)                 # [bt,S,dh]
        # Fold this head straight into the output projection: lane-dense [M,H] output,
        # Wo sliced along the (cheap) contraction/sublane axis. No ctx scratch.
        attn = attn + jnp.dot(c_h.reshape(M, dh).astype(jnp.bfloat16),
                              wo[h * dh:(h + 1) * dh, :],
                              preferred_element_type=jnp.float32)

    attn = attn + bo_ref[0]
    h1 = _layernorm(attn + x2, ag_ref[0], ab_ref[0], eps)                    # [M,H] f32

    # ---------------- Feed-forward ----------------
    m = jnp.dot(h1.astype(jnp.bfloat16), w1_ref[0],
                preferred_element_type=jnp.float32) + b1_ref[0]              # [M,I]
    if approx_gelu:
        # tanh-approx GELU routes through the EUP (otherwise-idle VLIW slot).
        m = jax.nn.gelu(m, approximate=True)
    else:
        # exact BERT gelu: x * 0.5 * (1 + erf(x / sqrt(2))) — matches the torch module.
        m = m * 0.5 * (1.0 + lax.erf(m * (1.0 / math.sqrt(2.0))))
    y = jnp.dot(m.astype(jnp.bfloat16), w2_ref[0],
                preferred_element_type=jnp.float32) + b2_ref[0]              # [M,H]
    out = _layernorm(y + h1, fg_ref[0], fb_ref[0], eps)

    out_ref[...] = out.reshape(bt, S, H)


# ----------------------------------------------------------------------------
# Per-chip defaults (VMEM budget, batch tile)
# ----------------------------------------------------------------------------

def _default_vmem_limit_bytes():
    try:
        phys = int(pltpu.get_tpu_info().vmem_capacity_bytes)
    except Exception:
        phys = 64 * 1024 * 1024          # conservative (v7x-sized) fallback
    # ~85% of physical: ~108 MiB on 128 MiB chips (v5e/v6e), ~54 MiB on v7x.
    return int(phys * 0.85)


def _default_batch_tile(batch):
    try:
        kind = jax.devices()[0].device_kind.lower()
    except Exception:
        kind = ""
    two_tensorcores = ("v7" in kind) or ("tpu7" in kind)
    if two_tensorcores and batch % 2 == 0:
        return batch // 2                # >= 2 batch tiles so both TCs get work on v7x
    return batch                         # single TC: stream each layer's weights once


# ----------------------------------------------------------------------------
# TemporalTrm forward (single pallas_call over the whole layer stack)
# ----------------------------------------------------------------------------

def temporal_trm_forward(params, frame_feat, pos_ids, attention_mask, *,
                         num_heads, eps, batch_tile=None, approx_gelu=False):
    """frame_feat: [B,S,H] f32, pos_ids: [B,S] i32,
       attention_mask: [B,1,1,S] additive (0 / -10000) extended mask.
       Returns sequence_output [B,S,H] (pool=False path of TemporalTrm.forward).
       Note: S should be a multiple of 8 (sublane tile) for cheap in-kernel reshapes."""
    B, S, H = frame_feat.shape
    L = params["wqkv"].shape[0]
    I = params["w1"].shape[-1]
    bt = _default_batch_tile(B) if batch_tile is None else batch_tile
    assert B % bt == 0 and H % num_heads == 0

    # Position-embedding gather + add stay in XLA (tiny glue); the LN is fused in-kernel.
    emb_sum = frame_feat + jnp.take(params["pos_emb"], pos_ids, axis=0)      # [B,S,H]
    # Keep the mask 3-D so its last-two block dims are always full-array dims.
    mask3 = attention_mask[:, 0, :, :].astype(jnp.float32)                   # [B,1,S]

    rep = lambda shape: pl.BlockSpec(shape, lambda b, l: (0,) * len(shape))
    per_layer = lambda shape: pl.BlockSpec((1,) + shape,
                                           lambda b, l: (l,) + (0,) * len(shape))

    kernel = functools.partial(_stack_kernel, num_heads=num_heads, eps=eps,
                               approx_gelu=approx_gelu)
    return pl.pallas_call(
        kernel,
        grid=(B // bt, L),
        in_specs=[
            pl.BlockSpec((bt, S, H), lambda b, l: (b, 0, 0)),    # frame_feat + pos_emb
            pl.BlockSpec((bt, 1, S), lambda b, l: (b, 0, 0)),    # additive mask
            rep((1, H)), rep((1, H)),                            # embedding LN
            per_layer((H, 3 * H)), per_layer((1, 3 * H)),        # fused QKV
            per_layer((H, H)), per_layer((1, H)),                # Wo
            per_layer((1, H)), per_layer((1, H)),                # attention LN
            per_layer((H, I)), per_layer((1, I)),                # W1
            per_layer((I, H)), per_layer((1, H)),                # W2
            per_layer((1, H)), per_layer((1, H)),                # FFN LN
        ],
        out_specs=pl.BlockSpec((bt, S, H), lambda b, l: (b, 0, 0)),  # resident across l
        out_shape=jax.ShapeDtypeStruct((B, S, H), jnp.float32),
        compiler_params=pltpu.CompilerParams(
            dimension_semantics=("parallel", "arbitrary"),
            vmem_limit_bytes=_default_vmem_limit_bytes(),
        ),
    )(emb_sum, mask3,
      params["emb_ln_g"], params["emb_ln_b"],
      params["wqkv"], params["bqkv"], params["wo"], params["bo"],
      params["attn_ln_g"], params["attn_ln_b"],
      params["w1"], params["b1"], params["w2"], params["b2"],
      params["ffn_ln_g"], params["ffn_ln_b"])


# ----------------------------------------------------------------------------
# Pure-JAX reference (f32) for correctness checking
# ----------------------------------------------------------------------------

def temporal_trm_reference(params, frame_feat, pos_ids, attention_mask, *, num_heads, eps):
    B, S, H = frame_feat.shape
    dh = H // num_heads
    mask = attention_mask[:, 0, 0, :]                                    # [B,S]
    h = frame_feat + jnp.take(params["pos_emb"], pos_ids, axis=0)
    h = _layernorm(h, params["emb_ln_g"][0], params["emb_ln_b"][0], eps)
    L = params["wqkv"].shape[0]
    for l in range(L):
        wqkv = params["wqkv"][l].astype(jnp.float32)
        qkv = jnp.einsum('bsh,hk->bsk', h, wqkv) + params["bqkv"][l][0]
        q = qkv[..., :H].reshape(B, S, num_heads, dh)
        k = qkv[..., H:2 * H].reshape(B, S, num_heads, dh)
        v = qkv[..., 2 * H:].reshape(B, S, num_heads, dh)
        s = jnp.einsum('bqnd,bknd->bnqk', q, k) / math.sqrt(dh)
        s = s + mask[:, None, None, :]
        p = jax.nn.softmax(s, axis=-1)
        ctx = jnp.einsum('bnqk,bknd->bqnd', p, v).reshape(B, S, H)
        attn = jnp.einsum('bsh,hk->bsk', ctx, params["wo"][l].astype(jnp.float32)) \
            + params["bo"][l][0]
        h = _layernorm(attn + h, params["attn_ln_g"][l][0], params["attn_ln_b"][l][0], eps)
        m = jnp.einsum('bsh,hi->bsi', h, params["w1"][l].astype(jnp.float32)) \
            + params["b1"][l][0]
        m = m * 0.5 * (1.0 + lax.erf(m / math.sqrt(2.0)))
        y = jnp.einsum('bsi,ih->bsh', m, params["w2"][l].astype(jnp.float32)) \
            + params["b2"][l][0]
        h = _layernorm(y + h, params["ffn_ln_g"][l][0], params["ffn_ln_b"][l][0], eps)
    return h


# ----------------------------------------------------------------------------
# Deterministic parameter init (matches module shapes; std=0.02), stacked per layer
# ----------------------------------------------------------------------------

def init_params(key, hidden, intermediate, num_layers, max_pos, std=0.02):
    f32, bf16 = jnp.float32, jnp.bfloat16
    H, I, L = hidden, intermediate, num_layers

    def nrm(k, shape, dtype):
        return (std * jax.random.normal(k, shape, dtype=jnp.float32)).astype(dtype)

    ks = jax.random.split(key, 5)
    return {
        "pos_emb": nrm(ks[0], (max_pos, H), f32),
        "emb_ln_g": jnp.ones((1, H), f32),
        "emb_ln_b": jnp.zeros((1, H), f32),
        # Matmul weights stored [in, out] (== nn.Linear weight.T) in bf16, stacked on a
        # leading layer axis; biases / LayerNorm params kept in f32.
        "wqkv": nrm(ks[1], (L, H, 3 * H), bf16),
        "bqkv": jnp.zeros((L, 1, 3 * H), f32),
        "wo": nrm(ks[2], (L, H, H), bf16),
        "bo": jnp.zeros((L, 1, H), f32),
        "attn_ln_g": jnp.ones((L, 1, H), f32),
        "attn_ln_b": jnp.zeros((L, 1, H), f32),
        "w1": nrm(ks[3], (L, H, I), bf16),
        "b1": jnp.zeros((L, 1, I), f32),
        "w2": nrm(ks[4], (L, I, H), bf16),
        "b2": jnp.zeros((L, 1, H), f32),
        "ffn_ln_g": jnp.ones((L, 1, H), f32),
        "ffn_ln_b": jnp.zeros((L, 1, H), f32),
    }


if __name__ == "__main__":
    # small config consistent with RobertaModelConfig semantics
    B, S, H = 2, 8, 32
    NUM_HEADS = 4
    INTERMEDIATE = 64
    NUM_LAYERS = 2
    MAX_POS = 16
    LN_EPS = 1e-12

    key = jax.random.PRNGKey(0)
    kp, kf = jax.random.split(key)

    params = init_params(kp, H, INTERMEDIATE, NUM_LAYERS, MAX_POS)

    clip_level_frame_feat = jax.random.normal(kf, (B, S, H), dtype=jnp.float32)
    clip_level_pos_ids = jnp.tile(jnp.arange(S, dtype=jnp.int32), (B, 1))

    # binary mask (second batch element has last 2 frames padded) -> extended additive mask
    binary_mask = jnp.ones((B, S), jnp.float32).at[1, S - 2:].set(0.0)
    attention_mask = (1.0 - binary_mask)[:, None, None, :] * -10000.0   # [B,1,1,S]

    out = temporal_trm_forward(params, clip_level_frame_feat, clip_level_pos_ids,
                               attention_mask, num_heads=NUM_HEADS, eps=LN_EPS)
    out = jax.block_until_ready(out)
    assert out.shape == (B, S, H) and bool(jnp.all(jnp.isfinite(out)))

    ref = temporal_trm_reference(params, clip_level_frame_feat, clip_level_pos_ids,
                                 attention_mask, num_heads=NUM_HEADS, eps=LN_EPS)
    max_err = float(jnp.max(jnp.abs(out - ref)))
    assert max_err < 0.15, f"kernel/reference mismatch: max abs err {max_err}"
    print("KERNEL_OK")
</pallas_src>

<mosaic_0001>
module attributes {stable_mosaic.version = 11 : i64} {
  func.func @_stack_kernel(%arg0: i32, %arg1: i32, %arg2: memref<2x8x32xf32, #tpu.memory_space<vmem>>, %arg3: memref<2x1x8xf32, #tpu.memory_space<vmem>>, %arg4: memref<1x32xf32, #tpu.memory_space<vmem>>, %arg5: memref<1x32xf32, #tpu.memory_space<vmem>>, %arg6: memref<1x32x96xbf16, #tpu.memory_space<vmem>>, %arg7: memref<1x1x96xf32, #tpu.memory_space<vmem>>, %arg8: memref<1x32x32xbf16, #tpu.memory_space<vmem>>, %arg9: memref<1x1x32xf32, #tpu.memory_space<vmem>>, %arg10: memref<1x1x32xf32, #tpu.memory_space<vmem>>, %arg11: memref<1x1x32xf32, #tpu.memory_space<vmem>>, %arg12: memref<1x32x64xbf16, #tpu.memory_space<vmem>>, %arg13: memref<1x1x64xf32, #tpu.memory_space<vmem>>, %arg14: memref<1x64x32xbf16, #tpu.memory_space<vmem>>, %arg15: memref<1x1x32xf32, #tpu.memory_space<vmem>>, %arg16: memref<1x1x32xf32, #tpu.memory_space<vmem>>, %arg17: memref<1x1x32xf32, #tpu.memory_space<vmem>>, %arg18: memref<2x8x32xf32, #tpu.memory_space<vmem>>) attributes {dimension_semantics = [#tpu.dimension_semantics<parallel>, #tpu.dimension_semantics<arbitrary>], iteration_bounds = array<i64: 1, 2>, scalar_prefetch = 0 : i64, scratch_operands = 0 : i64, tpu.core_type = #tpu.core_type<tc>, window_params = [{transform_indices = @transform_0, window_bounds = array<i64: 2, 8, 32>}, {transform_indices = @transform_1, window_bounds = array<i64: 2, 1, 8>}, {pipeline_mode = #tpu.pipeline_mode<synchronous>, transform_indices = @transform_2, window_bounds = array<i64: 1, 32>}, {pipeline_mode = #tpu.pipeline_mode<synchronous>, transform_indices = @transform_3, window_bounds = array<i64: 1, 32>}, {transform_indices = @transform_4, window_bounds = array<i64: 1, 32, 96>}, {transform_indices = @transform_5, window_bounds = array<i64: 1, 1, 96>}, {transform_indices = @transform_6, window_bounds = array<i64: 1, 32, 32>}, {transform_indices = @transform_7, window_bounds = array<i64: 1, 1, 32>}, {transform_indices = @transform_8, window_bounds = array<i64: 1, 1, 32>}, {transform_indices = @transform_9, window_bounds = array<i64: 1, 1, 32>}, {transform_indices = @transform_10, window_bounds = array<i64: 1, 32, 64>}, {transform_indices = @transform_11, window_bounds = array<i64: 1, 1, 64>}, {transform_indices = @transform_12, window_bounds = array<i64: 1, 64, 32>}, {transform_indices = @transform_13, window_bounds = array<i64: 1, 1, 32>}, {transform_indices = @transform_14, window_bounds = array<i64: 1, 1, 32>}, {transform_indices = @transform_15, window_bounds = array<i64: 1, 1, 32>}, {transform_indices = @transform_16, window_bounds = array<i64: 2, 8, 32>}]} {
    %c0_i32 = arith.constant 0 : i32
    %0 = arith.cmpi eq, %arg1, %c0_i32 : i32
    %1 = arith.extui %0 : i1 to i32
    %c0_i32_0 = arith.constant 0 : i32
    %2 = arith.cmpi ne, %1, %c0_i32_0 : i32
    scf.if %2 {
      %c0_85 = arith.constant 0 : index
      %c0_86 = arith.constant 0 : index
      %c0_87 = arith.constant 0 : index
      %199 = vector.load %arg2[%c0_85, %c0_86, %c0_87] : memref<2x8x32xf32, #tpu.memory_space<vmem>>, vector<2x8x32xf32>
      %c0_88 = arith.constant 0 : index
      %c0_89 = arith.constant 0 : index
      %200 = vector.load %arg4[%c0_88, %c0_89] : memref<1x32xf32, #tpu.memory_space<vmem>>, vector<1x32xf32>
      %c0_90 = arith.constant 0 : index
      %c0_91 = arith.constant 0 : index
      %201 = vector.load %arg5[%c0_90, %c0_91] : memref<1x32xf32, #tpu.memory_space<vmem>>, vector<1x32xf32>
      %cst_92 = arith.constant dense<0.000000e+00> : vector<2x8xf32>
      %202 = vector.multi_reduction <add>, %199, %cst_92 [2] : vector<2x8x32xf32> to vector<2x8xf32>
      %203 = vector.shape_cast %202 : vector<2x8xf32> to vector<2x8x1xf32>
      %cst_93 = arith.constant 3.200000e+01 : f32
      %204 = vector.broadcast %cst_93 : f32 to vector<2x8x1xf32>
      %205 = arith.divf %203, %204 : vector<2x8x1xf32>
      %206 = vector.broadcast %205 : vector<2x8x1xf32> to vector<2x8x32xf32>
      %207 = arith.subf %199, %206 : vector<2x8x32xf32>
      %208 = arith.mulf %207, %207 : vector<2x8x32xf32>
      %cst_94 = arith.constant dense<0.000000e+00> : vector<2x8xf32>
      %209 = vector.multi_reduction <add>, %208, %cst_94 [2] : vector<2x8x32xf32> to vector<2x8xf32>
      %210 = vector.shape_cast %209 : vector<2x8xf32> to vector<2x8x1xf32>
      %cst_95 = arith.constant 3.200000e+01 : f32
      %211 = vector.broadcast %cst_95 : f32 to vector<2x8x1xf32>
      %212 = arith.divf %210, %211 : vector<2x8x1xf32>
      %cst_96 = arith.constant 9.99999996E-13 : f32
      %213 = vector.broadcast %cst_96 : f32 to vector<2x8x1xf32>
      %214 = arith.addf %212, %213 : vector<2x8x1xf32>
      %215 = math.rsqrt %214 : vector<2x8x1xf32>
      %216 = vector.broadcast %215 : vector<2x8x1xf32> to vector<2x8x32xf32>
      %217 = arith.mulf %207, %216 : vector<2x8x32xf32>
      %218 = vector.shape_cast %200 : vector<1x32xf32> to vector<1x1x32xf32>
      %219 = vector.broadcast %218 : vector<1x1x32xf32> to vector<2x8x32xf32>
      %220 = arith.mulf %217, %219 : vector<2x8x32xf32>
      %221 = vector.shape_cast %201 : vector<1x32xf32> to vector<1x1x32xf32>
      %222 = vector.broadcast %221 : vector<1x1x32xf32> to vector<2x8x32xf32>
      %223 = arith.addf %220, %222 : vector<2x8x32xf32>
      %c0_97 = arith.constant 0 : index
      %c0_98 = arith.constant 0 : index
      %c0_99 = arith.constant 0 : index
      %224 = vector.load %arg18[%c0_97, %c0_98, %c0_99] : memref<2x8x32xf32, #tpu.memory_space<vmem>>, vector<2x8x32xf32>
      tpu.vector_store %arg18[%c0_97, %c0_98, %c0_99], %223 {strides = array<i32>} : memref<2x8x32xf32, #tpu.memory_space<vmem>>, vector<2x8x32xf32>,
    } else {
    }
    %c0 = arith.constant 0 : index
    %c0_1 = arith.constant 0 : index
    %c0_2 = arith.constant 0 : index
    %3 = vector.load %arg18[%c0, %c0_1, %c0_2] : memref<2x8x32xf32, #tpu.memory_space<vmem>>, vector<2x8x32xf32>
    %4 = vector.shape_cast %3 : vector<2x8x32xf32> to vector<16x32xf32>
    %5 = arith.truncf %4 : vector<16x32xf32> to vector<16x32xbf16>
    %c0_3 = arith.constant 0 : index
    %c0_4 = arith.constant 0 : index
    %c0_5 = arith.constant 0 : index
    %6 = vector.load %arg6[%c0_3, %c0_4, %c0_5] : memref<1x32x96xbf16, #tpu.memory_space<vmem>>, vector<1x32x96xbf16>
    %7 = vector.shape_cast %6 : vector<1x32x96xbf16> to vector<32x96xbf16>
    %cst = arith.constant dense<0.000000e+00> : vector<16x96xf32>
    %8 = tpu.matmul %5, %7, %cst {dimension_numbers = #tpu.dot_dimension_numbers<[1], [0], [0], [1], [0, 0, 1, 1], [], []>} : vector<16x32xbf16>, vector<32x96xbf16>, vector<16x96xf32> -> vector<16x96xf32>
    %c0_6 = arith.constant 0 : index
    %c0_7 = arith.constant 0 : index
    %c0_8 = arith.constant 0 : index
    %9 = vector.load %arg7[%c0_6, %c0_7, %c0_8] : memref<1x1x96xf32, #tpu.memory_space<vmem>>, vector<1x1x96xf32>
    %10 = vector.shape_cast %9 : vector<1x1x96xf32> to vector<1x96xf32>
    %11 = vector.broadcast %10 : vector<1x96xf32> to vector<16x96xf32>
    %12 = arith.addf %8, %11 : vector<16x96xf32>
    %13 = arith.truncf %12 : vector<16x96xf32> to vector<16x96xbf16>
    %14 = vector.shape_cast %13 : vector<16x96xbf16> to vector<2x8x96xbf16>
    %c0_9 = arith.constant 0 : index
    %c0_10 = arith.constant 0 : index
    %c0_11 = arith.constant 0 : index
    %15 = vector.load %arg3[%c0_9, %c0_10, %c0_11] : memref<2x1x8xf32, #tpu.memory_space<vmem>>, vector<2x1x8xf32>
    %c0_12 = arith.constant 0 : index
    %c0_13 = arith.constant 0 : index
    %c0_14 = arith.constant 0 : index
    %16 = vector.load %arg8[%c0_12, %c0_13, %c0_14] : memref<1x32x32xbf16, #tpu.memory_space<vmem>>, vector<1x32x32xbf16>
    %17 = vector.shape_cast %16 : vector<1x32x32xbf16> to vector<32x32xbf16>
    %cst_15 = arith.constant 0.000000e+00 : f32
    %18 = vector.broadcast %cst_15 : f32 to vector<16x32xf32>
    %19 = vector.extract_strided_slice %14 {offsets = [0, 0, 0], sizes = [2, 8, 8], strides = [1, 1, 1]} : vector<2x8x96xbf16> to vector<2x8x8xbf16>
    %20 = vector.extract_strided_slice %14 {offsets = [0, 0, 32], sizes = [2, 8, 8], strides = [1, 1, 1]} : vector<2x8x96xbf16> to vector<2x8x8xbf16>
    %21 = vector.extract_strided_slice %14 {offsets = [0, 0, 64], sizes = [2, 8, 8], strides = [1, 1, 1]} : vector<2x8x96xbf16> to vector<2x8x8xbf16>
    "tpu.trace_start"() <{level = 10 : i32, message = "bqd,bkd->bqk"}> : () -> ()
    %cst_16 = arith.constant dense<0.000000e+00> : vector<2x8x8xf32>
    %22 = tpu.matmul %19, %20, %cst_16 {dimension_numbers = #tpu.dot_dimension_numbers<[2], [2], [1], [1], [0, 0, 0, 1, 1, 1], [0], [0]>} : vector<2x8x8xbf16>, vector<2x8x8xbf16>, vector<2x8x8xf32> -> vector<2x8x8xf32>
    "tpu.trace_stop"() : () -> ()
    %cst_17 = arith.constant 0.353553385 : f32
    %23 = vector.broadcast %cst_17 : f32 to vector<2x8x8xf32>
    %24 = arith.mulf %22, %23 : vector<2x8x8xf32>
    %25 = vector.broadcast %15 : vector<2x1x8xf32> to vector<2x8x8xf32>
    %26 = arith.addf %24, %25 : vector<2x8x8xf32>
    %cst_18 = arith.constant dense<0xFF800000> : vector<2x8xf32>
    %27 = vector.multi_reduction <maximumf>, %26, %cst_18 [2] : vector<2x8x8xf32> to vector<2x8xf32>
    %28 = vector.shape_cast %27 : vector<2x8xf32> to vector<2x8x1xf32>
    %29 = vector.broadcast %28 : vector<2x8x1xf32> to vector<2x8x8xf32>
    %30 = arith.subf %26, %29 : vector<2x8x8xf32>
    %31 = math.exp %30 : vector<2x8x8xf32>
    %cst_19 = arith.constant dense<0.000000e+00> : vector<2x8xf32>
    %32 = vector.multi_reduction <add>, %31, %cst_19 [2] : vector<2x8x8xf32> to vector<2x8xf32>
    %33 = vector.shape_cast %32 : vector<2x8xf32> to vector<2x8x1xf32>
    %34 = tpu.reciprocal %33 {approx = true} : vector<2x8x1xf32> -> vector<2x8x1xf32>
    %35 = vector.broadcast %34 : vector<2x8x1xf32> to vector<2x8x8xf32>
    %36 = arith.mulf %31, %35 : vector<2x8x8xf32>
    %37 = arith.truncf %36 : vector<2x8x8xf32> to vector<2x8x8xbf16>
    "tpu.trace_start"() <{level = 10 : i32, message = "bqk,bkd->bqd"}> : () -> ()
    %cst_20 = arith.constant dense<0.000000e+00> : vector<2x8x8xf32>
    %38 = tpu.matmul %37, %21, %cst_20 {dimension_numbers = #tpu.dot_dimension_numbers<[2], [1], [1], [2], [0, 0, 0, 1, 1, 2], [0], [0]>} : vector<2x8x8xbf16>, vector<2x8x8xbf16>, vector<2x8x8xf32> -> vector<2x8x8xf32>
    "tpu.trace_stop"() : () -> ()
    %39 = vector.shape_cast %38 : vector<2x8x8xf32> to vector<16x8xf32>
    %40 = arith.truncf %39 : vector<16x8xf32> to vector<16x8xbf16>
    %41 = vector.extract_strided_slice %17 {offsets = [0, 0], sizes = [8, 32], strides = [1, 1]} : vector<32x32xbf16> to vector<8x32xbf16>
    %cst_21 = arith.constant dense<0.000000e+00> : vector<16x32xf32>
    %42 = tpu.matmul %40, %41, %cst_21 {dimension_numbers = #tpu.dot_dimension_numbers<[1], [0], [0], [1], [0, 0, 1, 1], [], []>} : vector<16x8xbf16>, vector<8x32xbf16>, vector<16x32xf32> -> vector<16x32xf32>
    %43 = arith.addf %18, %42 : vector<16x32xf32>
    %44 = vector.extract_strided_slice %14 {offsets = [0, 0, 8], sizes = [2, 8, 8], strides = [1, 1, 1]} : vector<2x8x96xbf16> to vector<2x8x8xbf16>
    %45 = vector.extract_strided_slice %14 {offsets = [0, 0, 40], sizes = [2, 8, 8], strides = [1, 1, 1]} : vector<2x8x96xbf16> to vector<2x8x8xbf16>
    %46 = vector.extract_strided_slice %14 {offsets = [0, 0, 72], sizes = [2, 8, 8], strides = [1, 1, 1]} : vector<2x8x96xbf16> to vector<2x8x8xbf16>
    "tpu.trace_start"() <{level = 10 : i32, message = "bqd,bkd->bqk"}> : () -> ()
    %cst_22 = arith.constant dense<0.000000e+00> : vector<2x8x8xf32>
    %47 = tpu.matmul %44, %45, %cst_22 {dimension_numbers = #tpu.dot_dimension_numbers<[2], [2], [1], [1], [0, 0, 0, 1, 1, 1], [0], [0]>} : vector<2x8x8xbf16>, vector<2x8x8xbf16>, vector<2x8x8xf32> -> vector<2x8x8xf32>
    "tpu.trace_stop"() : () -> ()
    %cst_23 = arith.constant 0.353553385 : f32
    %48 = vector.broadcast %cst_23 : f32 to vector<2x8x8xf32>
    %49 = arith.mulf %47, %48 : vector<2x8x8xf32>
    %50 = vector.broadcast %15 : vector<2x1x8xf32> to vector<2x8x8xf32>
    %51 = arith.addf %49, %50 : vector<2x8x8xf32>
    %cst_24 = arith.constant dense<0xFF800000> : vector<2x8xf32>
    %52 = vector.multi_reduction <maximumf>, %51, %cst_24 [2] : vector<2x8x8xf32> to vector<2x8xf32>
    %53 = vector.shape_cast %52 : vector<2x8xf32> to vector<2x8x1xf32>
    %54 = vector.broadcast %53 : vector<2x8x1xf32> to vector<2x8x8xf32>
    %55 = arith.subf %51, %54 : vector<2x8x8xf32>
    %56 = math.exp %55 : vector<2x8x8xf32>
    %cst_25 = arith.constant dense<0.000000e+00> : vector<2x8xf32>
    %57 = vector.multi_reduction <add>, %56, %cst_25 [2] : vector<2x8x8xf32> to vector<2x8xf32>
    %58 = vector.shape_cast %57 : vector<2x8xf32> to vector<2x8x1xf32>
    %59 = tpu.reciprocal %58 {approx = true} : vector<2x8x1xf32> -> vector<2x8x1xf32>
    %60 = vector.broadcast %59 : vector<2x8x1xf32> to vector<2x8x8xf32>
    %61 = arith.mulf %56, %60 : vector<2x8x8xf32>
    %62 = arith.truncf %61 : vector<2x8x8xf32> to vector<2x8x8xbf16>
    "tpu.trace_start"() <{level = 10 : i32, message = "bqk,bkd->bqd"}> : () -> ()
    %cst_26 = arith.constant dense<0.000000e+00> : vector<2x8x8xf32>
    %63 = tpu.matmul %62, %46, %cst_26 {dimension_numbers = #tpu.dot_dimension_numbers<[2], [1], [1], [2], [0, 0, 0, 1, 1, 2], [0], [0]>} : vector<2x8x8xbf16>, vector<2x8x8xbf16>, vector<2x8x8xf32> -> vector<2x8x8xf32>
    "tpu.trace_stop"() : () -> ()
    %64 = vector.shape_cast %63 : vector<2x8x8xf32> to vector<16x8xf32>
    %65 = arith.truncf %64 : vector<16x8xf32> to vector<16x8xbf16>
    %66 = vector.extract_strided_slice %17 {offsets = [8, 0], sizes = [8, 32], strides = [1, 1]} : vector<32x32xbf16> to vector<8x32xbf16>
    %cst_27 = arith.constant dense<0.000000e+00> : vector<16x32xf32>
    %67 = tpu.matmul %65, %66, %cst_27 {dimension_numbers = #tpu.dot_dimension_numbers<[1], [0], [0], [1], [0, 0, 1, 1], [], []>} : vector<16x8xbf16>, vector<8x32xbf16>, vector<16x32xf32> -> vector<16x32xf32>
    %68 = arith.addf %43, %67 : vector<16x32xf32>
    %69 = vector.extract_strided_slice %14 {offsets = [0, 0, 16], sizes = [2, 8, 8], strides = [1, 1, 1]} : vector<2x8x96xbf16> to vector<2x8x8xbf16>
    %70 = vector.extract_strided_slice %14 {offsets = [0, 0, 48], sizes = [2, 8, 8], strides = [1, 1, 1]} : vector<2x8x96xbf16> to vector<2x8x8xbf16>
    %71 = vector.extract_strided_slice %14 {offsets = [0, 0, 80], sizes = [2, 8, 8], strides = [1, 1, 1]} : vector<2x8x96xbf16> to vector<2x8x8xbf16>
    "tpu.trace_start"() <{level = 10 : i32, message = "bqd,bkd->bqk"}> : () -> ()
    %cst_28 = arith.constant dense<0.000000e+00> : vector<2x8x8xf32>
    %72 = tpu.matmul %69, %70, %cst_28 {dimension_numbers = #tpu.dot_dimension_numbers<[2], [2], [1], [1], [0, 0, 0, 1, 1, 1], [0], [0]>} : vector<2x8x8xbf16>, vector<2x8x8xbf16>, vector<2x8x8xf32> -> vector<2x8x8xf32>
    "tpu.trace_stop"() : () -> ()
    %cst_29 = arith.constant 0.353553385 : f32
    %73 = vector.broadcast %cst_29 : f32 to vector<2x8x8xf32>
    %74 = arith.mulf %72, %73 : vector<2x8x8xf32>
    %75 = vector.broadcast %15 : vector<2x1x8xf32> to vector<2x8x8xf32>
    %76 = arith.addf %74, %75 : vector<2x8x8xf32>
    %cst_30 = arith.constant dense<0xFF800000> : vector<2x8xf32>
    %77 = vector.multi_reduction <maximumf>, %76, %cst_30 [2] : vector<2x8x8xf32> to vector<2x8xf32>
    %78 = vector.shape_cast %77 : vector<2x8xf32> to vector<2x8x1xf32>
    %79 = vector.broadcast %78 : vector<2x8x1xf32> to vector<2x8x8xf32>
    %80 = arith.subf %76, %79 : vector<2x8x8xf32>
    %81 = math.exp %80 : vector<2x8x8xf32>
    %cst_31 = arith.constant dense<0.000000e+00> : vector<2x8xf32>
    %82 = vector.multi_reduction <add>, %81, %cst_31 [2] : vector<2x8x8xf32> to vector<2x8xf32>
    %83 = vector.shape_cast %82 : vector<2x8xf32> to vector<2x8x1xf32>
    %84 = tpu.reciprocal %83 {approx = true} : vector<2x8x1xf32> -> vector<2x8x1xf32>
    %85 = vector.broadcast %84 : vector<2x8x1xf32> to vector<2x8x8xf32>
    %86 = arith.mulf %81, %85 : vector<2x8x8xf32>
    %87 = arith.truncf %86 : vector<2x8x8xf32> to vector<2x8x8xbf16>
    "tpu.trace_start"() <{level = 10 : i32, message = "bqk,bkd->bqd"}> : () -> ()
    %cst_32 = arith.constant dense<0.000000e+00> : vector<2x8x8xf32>
    %88 = tpu.matmul %87, %71, %cst_32 {dimension_numbers = #tpu.dot_dimension_numbers<[2], [1], [1], [2], [0, 0, 0, 1, 1, 2], [0], [0]>} : vector<2x8x8xbf16>, vector<2x8x8xbf16>, vector<2x8x8xf32> -> vector<2x8x8xf32>
    "tpu.trace_stop"() : () -> ()
    %89 = vector.shape_cast %88 : vector<2x8x8xf32> to vector<16x8xf32>
    %90 = arith.truncf %89 : vector<16x8xf32> to vector<16x8xbf16>
    %91 = vector.extract_strided_slice %17 {offsets = [16, 0], sizes = [8, 32], strides = [1, 1]} : vector<32x32xbf16> to vector<8x32xbf16>
    %cst_33 = arith.constant dense<0.000000e+00> : vector<16x32xf32>
    %92 = tpu.matmul %90, %91, %cst_33 {dimension_numbers = #tpu.dot_dimension_numbers<[1], [0], [0], [1], [0, 0, 1, 1], [], []>} : vector<16x8xbf16>, vector<8x32xbf16>, vector<16x32xf32> -> vector<16x32xf32>
    %93 = arith.addf %68, %92 : vector<16x32xf32>
    %94 = vector.extract_strided_slice %14 {offsets = [0, 0, 24], sizes = [2, 8, 8], strides = [1, 1, 1]} : vector<2x8x96xbf16> to vector<2x8x8xbf16>
    %95 = vector.extract_strided_slice %14 {offsets = [0, 0, 56], sizes = [2, 8, 8], strides = [1, 1, 1]} : vector<2x8x96xbf16> to vector<2x8x8xbf16>
    %96 = vector.extract_strided_slice %14 {offsets = [0, 0, 88], sizes = [2, 8, 8], strides = [1, 1, 1]} : vector<2x8x96xbf16> to vector<2x8x8xbf16>
    "tpu.trace_start"() <{level = 10 : i32, message = "bqd,bkd->bqk"}> : () -> ()
    %cst_34 = arith.constant dense<0.000000e+00> : vector<2x8x8xf32>
    %97 = tpu.matmul %94, %95, %cst_34 {dimension_numbers = #tpu.dot_dimension_numbers<[2], [2], [1], [1], [0, 0, 0, 1, 1, 1], [0], [0]>} : vector<2x8x8xbf16>, vector<2x8x8xbf16>, vector<2x8x8xf32> -> vector<2x8x8xf32>
    "tpu.trace_stop"() : () -> ()
    %cst_35 = arith.constant 0.353553385 : f32
    %98 = vector.broadcast %cst_35 : f32 to vector<2x8x8xf32>
    %99 = arith.mulf %97, %98 : vector<2x8x8xf32>
    %100 = vector.broadcast %15 : vector<2x1x8xf32> to vector<2x8x8xf32>
    %101 = arith.addf %99, %100 : vector<2x8x8xf32>
    %cst_36 = arith.constant dense<0xFF800000> : vector<2x8xf32>
    %102 = vector.multi_reduction <maximumf>, %101, %cst_36 [2] : vector<2x8x8xf32> to vector<2x8xf32>
    %103 = vector.shape_cast %102 : vector<2x8xf32> to vector<2x8x1xf32>
    %104 = vector.broadcast %103 : vector<2x8x1xf32> to vector<2x8x8xf32>
    %105 = arith.subf %101, %104 : vector<2x8x8xf32>
    %106 = math.exp %105 : vector<2x8x8xf32>
    %cst_37 = arith.constant dense<0.000000e+00> : vector<2x8xf32>
    %107 = vector.multi_reduction <add>, %106, %cst_37 [2] : vector<2x8x8xf32> to vector<2x8xf32>
    %108 = vector.shape_cast %107 : vector<2x8xf32> to vector<2x8x1xf32>
    %109 = tpu.reciprocal %108 {approx = true} : vector<2x8x1xf32> -> vector<2x8x1xf32>
    %110 = vector.broadcast %109 : vector<2x8x1xf32> to vector<2x8x8xf32>
    %111 = arith.mulf %106, %110 : vector<2x8x8xf32>
    %112 = arith.truncf %111 : vector<2x8x8xf32> to vector<2x8x8xbf16>
    "tpu.trace_start"() <{level = 10 : i32, message = "bqk,bkd->bqd"}> : () -> ()
    %cst_38 = arith.constant dense<0.000000e+00> : vector<2x8x8xf32>
    %113 = tpu.matmul %112, %96, %cst_38 {dimension_numbers = #tpu.dot_dimension_numbers<[2], [1], [1], [2], [0, 0, 0, 1, 1, 2], [0], [0]>} : vector<2x8x8xbf16>, vector<2x8x8xbf16>, vector<2x8x8xf32> -> vector<2x8x8xf32>
    "tpu.trace_stop"() : () -> ()
    %114 = vector.shape_cast %113 : vector<2x8x8xf32> to vector<16x8xf32>
    %115 = arith.truncf %114 : vector<16x8xf32> to vector<16x8xbf16>
    %116 = vector.extract_strided_slice %17 {offsets = [24, 0], sizes = [8, 32], strides = [1, 1]} : vector<32x32xbf16> to vector<8x32xbf16>
    %cst_39 = arith.constant dense<0.000000e+00> : vector<16x32xf32>
    %117 = tpu.matmul %115, %116, %cst_39 {dimension_numbers = #tpu.dot_dimension_numbers<[1], [0], [0], [1], [0, 0, 1, 1], [], []>} : vector<16x8xbf16>, vector<8x32xbf16>, vector<16x32xf32> -> vector<16x32xf32>
    %118 = arith.addf %93, %117 : vector<16x32xf32>
    %c0_40 = arith.constant 0 : index
    %c0_41 = arith.constant 0 : index
    %c0_42 = arith.constant 0 : index
    %119 = vector.load %arg9[%c0_40, %c0_41, %c0_42] : memref<1x1x32xf32, #tpu.memory_space<vmem>>, vector<1x1x32xf32>
    %120 = vector.shape_cast %119 : vector<1x1x32xf32> to vector<1x32xf32>
    %121 = vector.broadcast %120 : vector<1x32xf32> to vector<16x32xf32>
    %122 = arith.addf %118, %121 : vector<16x32xf32>
    %123 = arith.addf %122, %4 : vector<16x32xf32>
    %c0_43 = arith.constant 0 : index
    %c0_44 = arith.constant 0 : index
    %c0_45 = arith.constant 0 : index
    %124 = vector.load %arg10[%c0_43, %c0_44, %c0_45] : memref<1x1x32xf32, #tpu.memory_space<vmem>>, vector<1x1x32xf32>
    %125 = vector.shape_cast %124 : vector<1x1x32xf32> to vector<1x32xf32>
    %c0_46 = arith.constant 0 : index
    %c0_47 = arith.constant 0 : index
    %c0_48 = arith.constant 0 : index
    %126 = vector.load %arg11[%c0_46, %c0_47, %c0_48] : memref<1x1x32xf32, #tpu.memory_space<vmem>>, vector<1x1x32xf32>
    %127 = vector.shape_cast %126 : vector<1x1x32xf32> to vector<1x32xf32>
    %cst_49 = arith.constant dense<0.000000e+00> : vector<16xf32>
    %128 = vector.multi_reduction <add>, %123, %cst_49 [1] : vector<16x32xf32> to vector<16xf32>
    %129 = vector.shape_cast %128 : vector<16xf32> to vector<16x1xf32>
    %cst_50 = arith.constant 3.200000e+01 : f32
    %130 = vector.broadcast %cst_50 : f32 to vector<16x1xf32>
    %131 = arith.divf %129, %130 : vector<16x1xf32>
    %132 = vector.broadcast %131 : vector<16x1xf32> to vector<16x32xf32>
    %133 = arith.subf %123, %132 : vector<16x32xf32>
    %134 = arith.mulf %133, %133 : vector<16x32xf32>
    %cst_51 = arith.constant dense<0.000000e+00> : vector<16xf32>
    %135 = vector.multi_reduction <add>, %134, %cst_51 [1] : vector<16x32xf32> to vector<16xf32>
    %136 = vector.shape_cast %135 : vector<16xf32> to vector<16x1xf32>
    %cst_52 = arith.constant 3.200000e+01 : f32
    %137 = vector.broadcast %cst_52 : f32 to vector<16x1xf32>
    %138 = arith.divf %136, %137 : vector<16x1xf32>
    %cst_53 = arith.constant 9.99999996E-13 : f32
    %139 = vector.broadcast %cst_53 : f32 to vector<16x1xf32>
    %140 = arith.addf %138, %139 : vector<16x1xf32>
    %141 = math.rsqrt %140 : vector<16x1xf32>
    %142 = vector.broadcast %141 : vector<16x1xf32> to vector<16x32xf32>
    %143 = arith.mulf %133, %142 : vector<16x32xf32>
    %144 = vector.broadcast %125 : vector<1x32xf32> to vector<16x32xf32>
    %145 = arith.mulf %143, %144 : vector<16x32xf32>
    %146 = vector.broadcast %127 : vector<1x32xf32> to vector<16x32xf32>
    %147 = arith.addf %145, %146 : vector<16x32xf32>
    %148 = arith.truncf %147 : vector<16x32xf32> to vector<16x32xbf16>
    %c0_54 = arith.constant 0 : index
    %c0_55 = arith.constant 0 : index
    %c0_56 = arith.constant 0 : index
    %149 = vector.load %arg12[%c0_54, %c0_55, %c0_56] : memref<1x32x64xbf16, #tpu.memory_space<vmem>>, vector<1x32x64xbf16>
    %150 = vector.shape_cast %149 : vector<1x32x64xbf16> to vector<32x64xbf16>
    %cst_57 = arith.constant dense<0.000000e+00> : vector<16x64xf32>
    %151 = tpu.matmul %148, %150, %cst_57 {dimension_numbers = #tpu.dot_dimension_numbers<[1], [0], [0], [1], [0, 0, 1, 1], [], []>} : vector<16x32xbf16>, vector<32x64xbf16>, vector<16x64xf32> -> vector<16x64xf32>
    %c0_58 = arith.constant 0 : index
    %c0_59 = arith.constant 0 : index
    %c0_60 = arith.constant 0 : index
    %152 = vector.load %arg13[%c0_58, %c0_59, %c0_60] : memref<1x1x64xf32, #tpu.memory_space<vmem>>, vector<1x1x64xf32>
    %153 = vector.shape_cast %152 : vector<1x1x64xf32> to vector<1x64xf32>
    %154 = vector.broadcast %153 : vector<1x64xf32> to vector<16x64xf32>
    %155 = arith.addf %151, %154 : vector<16x64xf32>
    %cst_61 = arith.constant 5.000000e-01 : f32
    %156 = vector.broadcast %cst_61 : f32 to vector<16x64xf32>
    %157 = arith.mulf %155, %156 : vector<16x64xf32>
    %cst_62 = arith.constant 0.707106769 : f32
    %158 = vector.broadcast %cst_62 : f32 to vector<16x64xf32>
    %159 = arith.mulf %155, %158 : vector<16x64xf32>
    %160 = math.erf %159 : vector<16x64xf32>
    %cst_63 = arith.constant 1.000000e+00 : f32
    %161 = vector.broadcast %cst_63 : f32 to vector<16x64xf32>
    %162 = arith.addf %161, %160 : vector<16x64xf32>
    %163 = arith.mulf %157, %162 : vector<16x64xf32>
    %164 = arith.truncf %163 : vector<16x64xf32> to vector<16x64xbf16>
    %c0_64 = arith.constant 0 : index
    %c0_65 = arith.constant 0 : index
    %c0_66 = arith.constant 0 : index
    %165 = vector.load %arg14[%c0_64, %c0_65, %c0_66] : memref<1x64x32xbf16, #tpu.memory_space<vmem>>, vector<1x64x32xbf16>
    %166 = vector.shape_cast %165 : vector<1x64x32xbf16> to vector<64x32xbf16>
    %cst_67 = arith.constant dense<0.000000e+00> : vector<16x32xf32>
    %167 = tpu.matmul %164, %166, %cst_67 {dimension_numbers = #tpu.dot_dimension_numbers<[1], [0], [0], [1], [0, 0, 1, 1], [], []>} : vector<16x64xbf16>, vector<64x32xbf16>, vector<16x32xf32> -> vector<16x32xf32>
    %c0_68 = arith.constant 0 : index
    %c0_69 = arith.constant 0 : index
    %c0_70 = arith.constant 0 : index
    %168 = vector.load %arg15[%c0_68, %c0_69, %c0_70] : memref<1x1x32xf32, #tpu.memory_space<vmem>>, vector<1x1x32xf32>
    %169 = vector.shape_cast %168 : vector<1x1x32xf32> to vector<1x32xf32>
    %170 = vector.broadcast %169 : vector<1x32xf32> to vector<16x32xf32>
    %171 = arith.addf %167, %170 : vector<16x32xf32>
    %172 = arith.addf %171, %147 : vector<16x32xf32>
    %c0_71 = arith.constant 0 : index
    %c0_72 = arith.constant 0 : index
    %c0_73 = arith.constant 0 : index
    %173 = vector.load %arg16[%c0_71, %c0_72, %c0_73] : memref<1x1x32xf32, #tpu.memory_space<vmem>>, vector<1x1x32xf32>
    %174 = vector.shape_cast %173 : vector<1x1x32xf32> to vector<1x32xf32>
    %c0_74 = arith.constant 0 : index
    %c0_75 = arith.constant 0 : index
    %c0_76 = arith.constant 0 : index
    %175 = vector.load %arg17[%c0_74, %c0_75, %c0_76] : memref<1x1x32xf32, #tpu.memory_space<vmem>>, vector<1x1x32xf32>
    %176 = vector.shape_cast %175 : vector<1x1x32xf32> to vector<1x32xf32>
    %cst_77 = arith.constant dense<0.000000e+00> : vector<16xf32>
    %177 = vector.multi_reduction <add>, %172, %cst_77 [1] : vector<16x32xf32> to vector<16xf32>
    %178 = vector.shape_cast %177 : vector<16xf32> to vector<16x1xf32>
    %cst_78 = arith.constant 3.200000e+01 : f32
    %179 = vector.broadcast %cst_78 : f32 to vector<16x1xf32>
    %180 = arith.divf %178, %179 : vector<16x1xf32>
    %181 = vector.broadcast %180 : vector<16x1xf32> to vector<16x32xf32>
    %182 = arith.subf %172, %181 : vector<16x32xf32>
    %183 = arith.mulf %182, %182 : vector<16x32xf32>
    %cst_79 = arith.constant dense<0.000000e+00> : vector<16xf32>
    %184 = vector.multi_reduction <add>, %183, %cst_79 [1] : vector<16x32xf32> to vector<16xf32>
    %185 = vector.shape_cast %184 : vector<16xf32> to vector<16x1xf32>
    %cst_80 = arith.constant 3.200000e+01 : f32
    %186 = vector.broadcast %cst_80 : f32 to vector<16x1xf32>
    %187 = arith.divf %185, %186 : vector<16x1xf32>
    %cst_81 = arith.constant 9.99999996E-13 : f32
    %188 = vector.broadcast %cst_81 : f32 to vector<16x1xf32>
    %189 = arith.addf %187, %188 : vector<16x1xf32>
    %190 = math.rsqrt %189 : vector<16x1xf32>
    %191 = vector.broadcast %190 : vector<16x1xf32> to vector<16x32xf32>
    %192 = arith.mulf %182, %191 : vector<16x32xf32>
    %193 = vector.broadcast %174 : vector<1x32xf32> to vector<16x32xf32>
    %194 = arith.mulf %192, %193 : vector<16x32xf32>
    %195 = vector.broadcast %176 : vector<1x32xf32> to vector<16x32xf32>
    %196 = arith.addf %194, %195 : vector<16x32xf32>
    %197 = vector.shape_cast %196 : vector<16x32xf32> to vector<2x8x32xf32>
    %c0_82 = arith.constant 0 : index
    %c0_83 = arith.constant 0 : index
    %c0_84 = arith.constant 0 : index
    %198 = vector.load %arg18[%c0_82, %c0_83, %c0_84] : memref<2x8x32xf32, #tpu.memory_space<vmem>>, vector<2x8x32xf32>
    tpu.vector_store %arg18[%c0_82, %c0_83, %c0_84], %197 {strides = array<i32>} : memref<2x8x32xf32, #tpu.memory_space<vmem>>, vector<2x8x32xf32>,
    return
  }
  func.func @transform_0(%arg0: i32, %arg1: i32) -> (i32, i32, i32) {
    %c0_i32 = arith.constant 0 : i32
    %c0_i32_0 = arith.constant 0 : i32
    %c0_i32_1 = arith.constant 0 : i32
    return %arg0, %c0_i32, %c0_i32_0 : i32, i32, i32
  }
  func.func @transform_1(%arg0: i32, %arg1: i32) -> (i32, i32, i32) {
    %c0_i32 = arith.constant 0 : i32
    %c0_i32_0 = arith.constant 0 : i32
    %c0_i32_1 = arith.constant 0 : i32
    return %arg0, %c0_i32, %c0_i32_0 : i32, i32, i32
  }
  func.func @transform_2(%arg0: i32, %arg1: i32) -> (i32, i32) {
    %c0_i32 = arith.constant 0 : i32
    %c0_i32_0 = arith.constant 0 : i32
    %c0_i32_1 = arith.constant 0 : i32
    return %c0_i32, %c0_i32_0 : i32, i32
  }
  func.func @transform_3(%arg0: i32, %arg1: i32) -> (i32, i32) {
    %c0_i32 = arith.constant 0 : i32
    %c0_i32_0 = arith.constant 0 : i32
    %c0_i32_1 = arith.constant 0 : i32
    return %c0_i32, %c0_i32_0 : i32, i32
  }
  func.func @transform_4(%arg0: i32, %arg1: i32) -> (i32, i32, i32) {
    %c0_i32 = arith.constant 0 : i32
    %c0_i32_0 = arith.constant 0 : i32
    %c0_i32_1 = arith.constant 0 : i32
    return %arg1, %c0_i32, %c0_i32_0 : i32, i32, i32
  }
  func.func @transform_5(%arg0: i32, %arg1: i32) -> (i32, i32, i32) {
    %c0_i32 = arith.constant 0 : i32
    %c0_i32_0 = arith.constant 0 : i32
    %c0_i32_1 = arith.constant 0 : i32
    return %arg1, %c0_i32, %c0_i32_0 : i32, i32, i32
  }
  func.func @transform_6(%arg0: i32, %arg1: i32) -> (i32, i32, i32) {
    %c0_i32 = arith.constant 0 : i32
    %c0_i32_0 = arith.constant 0 : i32
    %c0_i32_1 = arith.constant 0 : i32
    return %arg1, %c0_i32, %c0_i32_0 : i32, i32, i32
  }
  func.func @transform_7(%arg0: i32, %arg1: i32) -> (i32, i32, i32) {
    %c0_i32 = arith.constant 0 : i32
    %c0_i32_0 = arith.constant 0 : i32
    %c0_i32_1 = arith.constant 0 : i32
    return %arg1, %c0_i32, %c0_i32_0 : i32, i32, i32
  }
  func.func @transform_8(%arg0: i32, %arg1: i32) -> (i32, i32, i32) {
    %c0_i32 = arith.constant 0 : i32
    %c0_i32_0 = arith.constant 0 : i32
    %c0_i32_1 = arith.constant 0 : i32
    return %arg1, %c0_i32, %c0_i32_0 : i32, i32, i32
  }
  func.func @transform_9(%arg0: i32, %arg1: i32) -> (i32, i32, i32) {
    %c0_i32 = arith.constant 0 : i32
    %c0_i32_0 = arith.constant 0 : i32
    %c0_i32_1 = arith.constant 0 : i32
    return %arg1, %c0_i32, %c0_i32_0 : i32, i32, i32
  }
  func.func @transform_10(%arg0: i32, %arg1: i32) -> (i32, i32, i32) {
    %c0_i32 = arith.constant 0 : i32
    %c0_i32_0 = arith.constant 0 : i32
    %c0_i32_1 = arith.constant 0 : i32
    return %arg1, %c0_i32, %c0_i32_0 : i32, i32, i32
  }
  func.func @transform_11(%arg0: i32, %arg1: i32) -> (i32, i32, i32) {
    %c0_i32 = arith.constant 0 : i32
    %c0_i32_0 = arith.constant 0 : i32
    %c0_i32_1 = arith.constant 0 : i32
    return %arg1, %c0_i32, %c0_i32_0 : i32, i32, i32
  }
  func.func @transform_12(%arg0: i32, %arg1: i32) -> (i32, i32, i32) {
    %c0_i32 = arith.constant 0 : i32
    %c0_i32_0 = arith.constant 0 : i32
    %c0_i32_1 = arith.constant 0 : i32
    return %arg1, %c0_i32, %c0_i32_0 : i32, i32, i32
  }
  func.func @transform_13(%arg0: i32, %arg1: i32) -> (i32, i32, i32) {
    %c0_i32 = arith.constant 0 : i32
    %c0_i32_0 = arith.constant 0 : i32
    %c0_i32_1 = arith.constant 0 : i32
    return %arg1, %c0_i32, %c0_i32_0 : i32, i32, i32
  }
  func.func @transform_14(%arg0: i32, %arg1: i32) -> (i32, i32, i32) {
    %c0_i32 = arith.constant 0 : i32
    %c0_i32_0 = arith.constant 0 : i32
    %c0_i32_1 = arith.constant 0 : i32
    return %arg1, %c0_i32, %c0_i32_0 : i32, i32, i32
  }
  func.func @transform_15(%arg0: i32, %arg1: i32) -> (i32, i32, i32) {
    %c0_i32 = arith.constant 0 : i32
    %c0_i32_0 = arith.constant 0 : i32
    %c0_i32_1 = arith.constant 0 : i32
    return %arg1, %c0_i32, %c0_i32_0 : i32, i32, i32
  }
  func.func @transform_16(%arg0: i32, %arg1: i32) -> (i32, i32, i32) {
    %c0_i32 = arith.constant 0 : i32
    %c0_i32_0 = arith.constant 0 : i32
    %c0_i32_1 = arith.constant 0 : i32
    return %arg0, %c0_i32, %c0_i32_0 : i32, i32, i32
  }
}

</mosaic_0001>

<llo_original>
// kernel: tpu_custom_call.1
$region0: #{tpu_custom_call.1}
  #allocation0 [shape = 'u32[]', space=smem, size = 0x4, offset = 0x4, fixed_abs, tag = 'smem constant byte address 0x4 - core index']
  #allocation1 [shape = 'u32[144,128]{1,0:T(1,128)}', space=vmem, size = 0x12000, scoped, tag = 'internal scratch']
  %s0 = inlined_call_operand.hbm [shape: f32[2,8,32], index: 0, kind: input, shape index: {}]
  %s1 = inlined_call_operand.hbm [shape: f32[2,1,8], index: 1, kind: input, shape index: {}]
  %s2 = inlined_call_operand.hbm [shape: f32[1,32], index: 2, kind: input, shape index: {}]
  %s3 = inlined_call_operand.hbm [shape: f32[1,32], index: 3, kind: input, shape index: {}]
  %s4 = inlined_call_operand.vmem [shape: bf16[2,32,96], index: 4, kind: input, shape index: {}]
  %s5 = inlined_call_operand.vmem [shape: f32[2,1,96], index: 5, kind: input, shape index: {}]
  %s6 = inlined_call_operand.vmem [shape: bf16[2,32,32], index: 6, kind: input, shape index: {}]
  %s7 = inlined_call_operand.vmem [shape: f32[2,1,32], index: 7, kind: input, shape index: {}]
  %s8 = inlined_call_operand.vmem [shape: f32[2,1,32], index: 8, kind: input, shape index: {}]
  %s9 = inlined_call_operand.vmem [shape: f32[2,1,32], index: 9, kind: input, shape index: {}]
  %s10 = inlined_call_operand.vmem [shape: bf16[2,32,64], index: 10, kind: input, shape index: {}]
  %s11 = inlined_call_operand.vmem [shape: f32[2,1,64], index: 11, kind: input, shape index: {}]
  %s12 = inlined_call_operand.vmem [shape: bf16[2,64,32], index: 12, kind: input, shape index: {}]
  %s13 = inlined_call_operand.vmem [shape: f32[2,1,32], index: 13, kind: input, shape index: {}]
  %s14 = inlined_call_operand.vmem [shape: f32[2,1,32], index: 14, kind: input, shape index: {}]
  %s15 = inlined_call_operand.vmem [shape: f32[2,1,32], index: 15, kind: input, shape index: {}]
  %s16 = inlined_call_operand.hbm [shape: f32[2,8,32], index: 16, kind: output, shape index: {}]
  %s17 = sld [smem:[#allocation0]]
  $region117: #{tpu_custom_call.1} parent=0
    _
  %s19 = ssub.s32 1, %s17
  %s20 = scalar_select 0, %s19, %s17
  $region1: #{tpu_custom_call.1} parent=0
    #allocation2 [shape = 'u8[8192]{0}', space=vmem, size = 0x2000, scoped, tag = 'input window, operand 0, single buffered']
    #allocation3 [shape = 's32[2]{0}', space=sflag, size = 0x8, scoped, tag = 'scoped memory for tpu_custom_call.1']
    #allocation4 [shape = 's32[2]{0}', space=sflag, size = 0x8, scoped, tag = 'scoped memory for tpu_custom_call.1']
    #allocation5 [shape = 'u8[1024]{0}', space=vmem, size = 0x400, scoped, tag = 'input window, operand 1, single buffered']
    #allocation6 [shape = 's32[1]{0}', space=sflag, size = 0x4, scoped, tag = 'scoped memory for tpu_custom_call.1']
    #allocation7 [shape = 'u8[512]{0}', space=vmem, size = 0x400, scoped, tag = 'input window, operand 2, single buffered']
    #allocation8 [shape = 'u8[512]{0}', space=vmem, size = 0x400, scoped, tag = 'input window, operand 3, single buffered']
    #allocation9 [shape = 's32[1]{0}', space=sflag, size = 0x4, scoped, tag = 'scoped memory for tpu_custom_call.1']
    #allocation10 [shape = 'u8[8192]{0}', space=vmem, size = 0x2000, scoped, tag = 'output window, operand 0, single buffered']
    %21 = vsyncpa [#allocation3], 0
    %22 = vsyncpa [#allocation6], 0
    %23 = vsyncpa [#allocation9], 0
    %24 = vsyncpa [#allocation4], 0
    loop: start=0, step=1, limit=4
    $region2: #{tpu_custom_call.1} parent=1 // loop_pre_header
      _
    $region3: #{tpu_custom_call.1} parent=1 // loop_header
      %s26 = sphi 0, %s30
      %p27 = scmp.ge.s32.totalorder %s26, 4
      %s33 = sphi 0, %s45
      %s34 = sphi 0, %s41
      %s35 = sphi 0, %s33
      %s36 = sphi 0, %s34
      %s37 = sphi 0, %s35
      %s38 = sphi 0, %s36
      %s48 = sphi 0, %s50
      %s51 = sphi 0, %s48
      %s52 = sphi 0, %s51
      %s68 = sphi 0, %s52
      %s74 = sphi 0, %s76
      %s77 = sphi 0, %s74
      %s78 = sphi 0, %s77
      %s94 = sphi 0, %s78
      %s98 = sphi 0, %s98
      %s100 = sphi 0, %s98
      %s101 = sphi 0, %s100
      %s115 = sphi 0, %s101
      %s119 = sphi 0, %s119
      %s121 = sphi 0, %s119
      %s122 = sphi 0, %s121
      %s136 = sphi 0, %s122
      %s142 = sphi 0, %s144
      %s145 = sphi 0, %s142
      %s146 = sphi 0, %s145
      %s162 = sphi 0, %s146
      %s168 = sphi 0, %s170
      %s171 = sphi 0, %s168
      %s172 = sphi 0, %s171
      %s188 = sphi 0, %s172
      %s194 = sphi 0, %s196
      %s197 = sphi 0, %s194
      %s198 = sphi 0, %s197
      %s214 = sphi 0, %s198
      %s220 = sphi 0, %s222
      %s223 = sphi 0, %s220
      %s224 = sphi 0, %s223
      %s240 = sphi 0, %s224
      %s246 = sphi 0, %s248
      %s249 = sphi 0, %s246
      %s250 = sphi 0, %s249
      %s266 = sphi 0, %s250
      %s272 = sphi 0, %s274
      %s275 = sphi 0, %s272
      %s276 = sphi 0, %s275
      %s292 = sphi 0, %s276
      %s298 = sphi 0, %s300
      %s301 = sphi 0, %s298
      %s302 = sphi 0, %s301
      %s318 = sphi 0, %s302
      %s324 = sphi 0, %s326
      %s327 = sphi 0, %s324
      %s328 = sphi 0, %s327
      %s344 = sphi 0, %s328
      %s350 = sphi 0, %s352
      %s353 = sphi 0, %s350
      %s354 = sphi 0, %s353
      %s370 = sphi 0, %s354
      %s376 = sphi 0, %s378
      %s379 = sphi 0, %s376
      %s380 = sphi 0, %s379
      %s396 = sphi 0, %s380
      %s402 = sphi 0, %s404
      %s405 = sphi 0, %s402
      %s406 = sphi 0, %s405
      %s422 = sphi 0, %s406
      %s428 = sphi 0, %s430
      %s431 = sphi 0, %s428
      %s432 = sphi 0, %s431
      %s448 = sphi 0, %s432
      %s454 = sphi 0, %s456
      %s457 = sphi 0, %s454
      %s458 = sphi 0, %s457
      %s474 = sphi 0, %s458
    $region4: #{tpu_custom_call.1} parent=1 // loop_header_branch
      %29 = sbr.rel (%p27) target = $region8
    $region5: #{tpu_custom_call.1} parent=1 // loop_body
      %s31 = ssub.s32 %s26, 1
      %s32 = ssub.s32 %s26, 2
      %s39 = sadd.s32 1, %s34
      %p40 = scmp.ge.s32.totalorder %s39, 2
      %s41 = scalar_select %p40, 0, %s39
      %s42 = sadd.s32 1, %s33
      %s43 = scalar_select %p40, %s42, %s33
      %p44 = scmp.ge.s32.totalorder %s43, 1
      %s45 = scalar_select %p44, 0, %s43
      %s46 = ssub.s32 %s33, %s45
      %p47 = scmp.eq.s32.totalorder %s46, 0
      %s49 = sadd.s32 %s48, 1
      %s50 = scalar_select %p47, %s48, %s49
      %p53 = pneg %p47
      %p54 = scmp.eq.s32.totalorder %s26, 1
      %p55 = por %p53, %p54
      %p56 = scmp.ne.s32.totalorder %s48, %s51
      %p57 = scmp.eq.s32.totalorder %s26, 0
      %p58 = por %p56, %p57
      %p59 = scmp.ne.s32.totalorder %s48, %s51
      %p60 = scmp.eq.s32.totalorder %s31, 1
      %p61 = por %p59, %p60
      %p62 = scmp.ne.s32.totalorder %s51, %s52
      %p63 = scmp.eq.s32.totalorder %s31, 0
      %p64 = por %p62, %p63
      %p65 = scmp.ne.s32.totalorder %s51, %s52
      %p66 = scmp.eq.s32.totalorder %s32, 1
      %p67 = por %p65, %p66
      %p69 = scmp.ne.s32.totalorder %s52, %s68
      %p70 = scmp.eq.s32.totalorder %s32, 0
      %p71 = por %p69, %p70
      %s72 = ssub.s32 %s33, %s45
      %p73 = scmp.eq.s32.totalorder %s72, 0
      %s75 = sadd.s32 %s74, 1
      %s76 = scalar_select %p73, %s74, %s75
      %p79 = pneg %p73
      %p80 = scmp.eq.s32.totalorder %s26, 1
      %p81 = por %p79, %p80
      %p82 = scmp.ne.s32.totalorder %s74, %s77
      %p83 = scmp.eq.s32.totalorder %s26, 0
      %p84 = por %p82, %p83
      %p85 = scmp.ne.s32.totalorder %s74, %s77
      %p86 = scmp.eq.s32.totalorder %s31, 1
      %p87 = por %p85, %p86
      %p88 = scmp.ne.s32.totalorder %s77, %s78
      %p89 = scmp.eq.s32.totalorder %s31, 0
      %p90 = por %p88, %p89
      %p91 = scmp.ne.s32.totalorder %s77, %s78
      %p92 = scmp.eq.s32.totalorder %s32, 1
      %p93 = por %p91, %p92
      %p95 = scmp.ne.s32.totalorder %s78, %s94
      %p96 = scmp.eq.s32.totalorder %s32, 0
      %p97 = por %p95, %p96
      %s99 = sadd.s32 %s98, 1
      %p102 = scmp.eq.s32.totalorder %s26, 1
      %p103 = scmp.ne.s32.totalorder %s98, %s100
      %p104 = scmp.eq.s32.totalorder %s26, 0
      %p105 = por %p103, %p104
      %p106 = scmp.ne.s32.totalorder %s98, %s100
      %p107 = scmp.eq.s32.totalorder %s31, 1
      %p108 = por %p106, %p107
      %p109 = scmp.ne.s32.totalorder %s100, %s101
      %p110 = scmp.eq.s32.totalorder %s31, 0
      %p111 = por %p109, %p110
      %p112 = scmp.ne.s32.totalorder %s100, %s101
      %p113 = scmp.eq.s32.totalorder %s32, 1
      %p114 = por %p112, %p113
      %p116 = scmp.ne.s32.totalorder %s101, %s115
      %p117 = scmp.eq.s32.totalorder %s32, 0
      %p118 = por %p116, %p117
      %s120 = sadd.s32 %s119, 1
      %p123 = scmp.eq.s32.totalorder %s26, 1
      %p124 = scmp.ne.s32.totalorder %s119, %s121
      %p125 = scmp.eq.s32.totalorder %s26, 0
      %p126 = por %p124, %p125
      %p127 = scmp.ne.s32.totalorder %s119, %s121
      %p128 = scmp.eq.s32.totalorder %s31, 1
      %p129 = por %p127, %p128
      %p130 = scmp.ne.s32.totalorder %s121, %s122
      %p131 = scmp.eq.s32.totalorder %s31, 0
      %p132 = por %p130, %p131
      %p133 = scmp.ne.s32.totalorder %s121, %s122
      %p134 = scmp.eq.s32.totalorder %s32, 1
      %p135 = por %p133, %p134
      %p137 = scmp.ne.s32.totalorder %s122, %s136
      %p138 = scmp.eq.s32.totalorder %s32, 0
      %p139 = por %p137, %p138
      %s140 = ssub.s32 %s34, %s41
      %p141 = scmp.eq.s32.totalorder %s140, 0
      %s143 = sadd.s32 %s142, 1
      %s144 = scalar_select %p141, %s142, %s143
      %p147 = pneg %p141
      %p148 = scmp.eq.s32.totalorder %s26, 1
      %p149 = por %p147, %p148
      %p150 = scmp.ne.s32.totalorder %s142, %s145
      %p151 = scmp.eq.s32.totalorder %s26, 0
      %p152 = por %p150, %p151
      %p153 = scmp.ne.s32.totalorder %s142, %s145
      %p154 = scmp.eq.s32.totalorder %s31, 1
      %p155 = por %p153, %p154
      %p156 = scmp.ne.s32.totalorder %s145, %s146
      %p157 = scmp.eq.s32.totalorder %s31, 0
      %p158 = por %p156, %p157
      %p159 = scmp.ne.s32.totalorder %s145, %s146
      %p160 = scmp.eq.s32.totalorder %s32, 1
      %p161 = por %p159, %p160
      %p163 = scmp.ne.s32.totalorder %s146, %s162
      %p164 = scmp.eq.s32.totalorder %s32, 0
      %p165 = por %p163, %p164
      %s166 = ssub.s32 %s34, %s41
      %p167 = scmp.eq.s32.totalorder %s166, 0
      %s169 = sadd.s32 %s168, 1
      %s170 = scalar_select %p167, %s168, %s169
      %p173 = pneg %p167
      %p174 = scmp.eq.s32.totalorder %s26, 1
      %p175 = por %p173, %p174
      %p176 = scmp.ne.s32.totalorder %s168, %s171
      %p177 = scmp.eq.s32.totalorder %s26, 0
      %p178 = por %p176, %p177
      %p179 = scmp.ne.s32.totalorder %s168, %s171
      %p180 = scmp.eq.s32.totalorder %s31, 1
      %p181 = por %p179, %p180
      %p182 = scmp.ne.s32.totalorder %s171, %s172
      %p183 = scmp.eq.s32.totalorder %s31, 0
      %p184 = por %p182, %p183
      %p185 = scmp.ne.s32.totalorder %s171, %s172
      %p186 = scmp.eq.s32.totalorder %s32, 1
      %p187 = por %p185, %p186
      %p189 = scmp.ne.s32.totalorder %s172, %s188
      %p190 = scmp.eq.s32.totalorder %s32, 0
      %p191 = por %p189, %p190
      %s192 = ssub.s32 %s34, %s41
      %p193 = scmp.eq.s32.totalorder %s192, 0
      %s195 = sadd.s32 %s194, 1
      %s196 = scalar_select %p193, %s194, %s195
      %p199 = pneg %p193
      %p200 = scmp.eq.s32.totalorder %s26, 1
      %p201 = por %p199, %p200
      %p202 = scmp.ne.s32.totalorder %s194, %s197
      %p203 = scmp.eq.s32.totalorder %s26, 0
      %p204 = por %p202, %p203
      %p205 = scmp.ne.s32.totalorder %s194, %s197
      %p206 = scmp.eq.s32.totalorder %s31, 1
      %p207 = por %p205, %p206
      %p208 = scmp.ne.s32.totalorder %s197, %s198
      %p209 = scmp.eq.s32.totalorder %s31, 0
      %p210 = por %p208, %p209
      %p211 = scmp.ne.s32.totalorder %s197, %s198
      %p212 = scmp.eq.s32.totalorder %s32, 1
      %p213 = por %p211, %p212
      %p215 = scmp.ne.s32.totalorder %s198, %s214
      %p216 = scmp.eq.s32.totalorder %s32, 0
      %p217 = por %p215, %p216
      %s218 = ssub.s32 %s34, %s41
      %p219 = scmp.eq.s32.totalorder %s218, 0
      %s221 = sadd.s32 %s220, 1
      %s222 = scalar_select %p219, %s220, %s221
      %p225 = pneg %p219
      %p226 = scmp.eq.s32.totalorder %s26, 1
      %p227 = por %p225, %p226
      %p228 = scmp.ne.s32.totalorder %s220, %s223
      %p229 = scmp.eq.s32.totalorder %s26, 0
      %p230 = por %p228, %p229
      %p231 = scmp.ne.s32.totalorder %s220, %s223
      %p232 = scmp.eq.s32.totalorder %s31, 1
      %p233 = por %p231, %p232
      %p234 = scmp.ne.s32.totalorder %s223, %s224
      %p235 = scmp.eq.s32.totalorder %s31, 0
      %p236 = por %p234, %p235
      %p237 = scmp.ne.s32.totalorder %s223, %s224
      %p238 = scmp.eq.s32.totalorder %s32, 1
      %p239 = por %p237, %p238
      %p241 = scmp.ne.s32.totalorder %s224, %s240
      %p242 = scmp.eq.s32.totalorder %s32, 0
      %p243 = por %p241, %p242
      %s244 = ssub.s32 %s34, %s41
      %p245 = scmp.eq.s32.totalorder %s244, 0
      %s247 = sadd.s32 %s246, 1
      %s248 = scalar_select %p245, %s246, %s247
      %p251 = pneg %p245
      %p252 = scmp.eq.s32.totalorder %s26, 1
      %p253 = por %p251, %p252
      %p254 = scmp.ne.s32.totalorder %s246, %s249
      %p255 = scmp.eq.s32.totalorder %s26, 0
      %p256 = por %p254, %p255
      %p257 = scmp.ne.s32.totalorder %s246, %s249
      %p258 = scmp.eq.s32.totalorder %s31, 1
      %p259 = por %p257, %p258
      %p260 = scmp.ne.s32.totalorder %s249, %s250
      %p261 = scmp.eq.s32.totalorder %s31, 0
      %p262 = por %p260, %p261
      %p263 = scmp.ne.s32.totalorder %s249, %s250
      %p264 = scmp.eq.s32.totalorder %s32, 1
      %p265 = por %p263, %p264
      %p267 = scmp.ne.s32.totalorder %s250, %s266
      %p268 = scmp.eq.s32.totalorder %s32, 0
      %p269 = por %p267, %p268
      %s270 = ssub.s32 %s34, %s41
      %p271 = scmp.eq.s32.totalorder %s270, 0
      %s273 = sadd.s32 %s272, 1
      %s274 = scalar_select %p271, %s272, %s273
      %p277 = pneg %p271
      %p278 = scmp.eq.s32.totalorder %s26, 1
      %p279 = por %p277, %p278
      %p280 = scmp.ne.s32.totalorder %s272, %s275
      %p281 = scmp.eq.s32.totalorder %s26, 0
      %p282 = por %p280, %p281
      %p283 = scmp.ne.s32.totalorder %s272, %s275
      %p284 = scmp.eq.s32.totalorder %s31, 1
      %p285 = por %p283, %p284
      %p286 = scmp.ne.s32.totalorder %s275, %s276
      %p287 = scmp.eq.s32.totalorder %s31, 0
      %p288 = por %p286, %p287
      %p289 = scmp.ne.s32.totalorder %s275, %s276
      %p290 = scmp.eq.s32.totalorder %s32, 1
      %p291 = por %p289, %p290
      %p293 = scmp.ne.s32.totalorder %s276, %s292
      %p294 = scmp.eq.s32.totalorder %s32, 0
      %p295 = por %p293, %p294
      %s296 = ssub.s32 %s34, %s41
      %p297 = scmp.eq.s32.totalorder %s296, 0
      %s299 = sadd.s32 %s298, 1
      %s300 = scalar_select %p297, %s298, %s299
      %p303 = pneg %p297
      %p304 = scmp.eq.s32.totalorder %s26, 1
      %p305 = por %p303, %p304
      %p306 = scmp.ne.s32.totalorder %s298, %s301
      %p307 = scmp.eq.s32.totalorder %s26, 0
      %p308 = por %p306, %p307
      %p309 = scmp.ne.s32.totalorder %s298, %s301
      %p310 = scmp.eq.s32.totalorder %s31, 1
      %p311 = por %p309, %p310
      %p312 = scmp.ne.s32.totalorder %s301, %s302
      %p313 = scmp.eq.s32.totalorder %s31, 0
      %p314 = por %p312, %p313
      %p315 = scmp.ne.s32.totalorder %s301, %s302
      %p316 = scmp.eq.s32.totalorder %s32, 1
      %p317 = por %p315, %p316
      %p319 = scmp.ne.s32.totalorder %s302, %s318
      %p320 = scmp.eq.s32.totalorder %s32, 0
      %p321 = por %p319, %p320
      %s322 = ssub.s32 %s34, %s41
      %p323 = scmp.eq.s32.totalorder %s322, 0
      %s325 = sadd.s32 %s324, 1
      %s326 = scalar_select %p323, %s324, %s325
      %p329 = pneg %p323
      %p330 = scmp.eq.s32.totalorder %s26, 1
      %p331 = por %p329, %p330
      %p332 = scmp.ne.s32.totalorder %s324, %s327
      %p333 = scmp.eq.s32.totalorder %s26, 0
      %p334 = por %p332, %p333
      %p335 = scmp.ne.s32.totalorder %s324, %s327
      %p336 = scmp.eq.s32.totalorder %s31, 1
      %p337 = por %p335, %p336
      %p338 = scmp.ne.s32.totalorder %s327, %s328
      %p339 = scmp.eq.s32.totalorder %s31, 0
      %p340 = por %p338, %p339
      %p341 = scmp.ne.s32.totalorder %s327, %s328
      %p342 = scmp.eq.s32.totalorder %s32, 1
      %p343 = por %p341, %p342
      %p345 = scmp.ne.s32.totalorder %s328, %s344
      %p346 = scmp.eq.s32.totalorder %s32, 0
      %p347 = por %p345, %p346
      %s348 = ssub.s32 %s34, %s41
      %p349 = scmp.eq.s32.totalorder %s348, 0
      %s351 = sadd.s32 %s350, 1
      %s352 = scalar_select %p349, %s350, %s351
      %p355 = pneg %p349
      %p356 = scmp.eq.s32.totalorder %s26, 1
      %p357 = por %p355, %p356
      %p358 = scmp.ne.s32.totalorder %s350, %s353
      %p359 = scmp.eq.s32.totalorder %s26, 0
      %p360 = por %p358, %p359
      %p361 = scmp.ne.s32.totalorder %s350, %s353
      %p362 = scmp.eq.s32.totalorder %s31, 1
      %p363 = por %p361, %p362
      %p364 = scmp.ne.s32.totalorder %s353, %s354
      %p365 = scmp.eq.s32.totalorder %s31, 0
      %p366 = por %p364, %p365
      %p367 = scmp.ne.s32.totalorder %s353, %s354
      %p368 = scmp.eq.s32.totalorder %s32, 1
      %p369 = por %p367, %p368
      %p371 = scmp.ne.s32.totalorder %s354, %s370
      %p372 = scmp.eq.s32.totalorder %s32, 0
      %p373 = por %p371, %p372
      %s374 = ssub.s32 %s34, %s41
      %p375 = scmp.eq.s32.totalorder %s374, 0
      %s377 = sadd.s32 %s376, 1
      %s378 = scalar_select %p375, %s376, %s377
      %p381 = pneg %p375
      %p382 = scmp.eq.s32.totalorder %s26, 1
      %p383 = por %p381, %p382
      %p384 = scmp.ne.s32.totalorder %s376, %s379
      %p385 = scmp.eq.s32.totalorder %s26, 0
      %p386 = por %p384, %p385
      %p387 = scmp.ne.s32.totalorder %s376, %s379
      %p388 = scmp.eq.s32.totalorder %s31, 1
      %p389 = por %p387, %p388
      %p390 = scmp.ne.s32.totalorder %s379, %s380
      %p391 = scmp.eq.s32.totalorder %s31, 0
      %p392 = por %p390, %p391
      %p393 = scmp.ne.s32.totalorder %s379, %s380
      %p394 = scmp.eq.s32.totalorder %s32, 1
      %p395 = por %p393, %p394
      %p397 = scmp.ne.s32.totalorder %s380, %s396
      %p398 = scmp.eq.s32.totalorder %s32, 0
      %p399 = por %p397, %p398
      %s400 = ssub.s32 %s34, %s41
      %p401 = scmp.eq.s32.totalorder %s400, 0
      %s403 = sadd.s32 %s402, 1
      %s404 = scalar_select %p401, %s402, %s403
      %p407 = pneg %p401
      %p408 = scmp.eq.s32.totalorder %s26, 1
      %p409 = por %p407, %p408
      %p410 = scmp.ne.s32.totalorder %s402, %s405
      %p411 = scmp.eq.s32.totalorder %s26, 0
      %p412 = por %p410, %p411
      %p413 = scmp.ne.s32.totalorder %s402, %s405
      %p414 = scmp.eq.s32.totalorder %s31, 1
      %p415 = por %p413, %p414
      %p416 = scmp.ne.s32.totalorder %s405, %s406
      %p417 = scmp.eq.s32.totalorder %s31, 0
      %p418 = por %p416, %p417
      %p419 = scmp.ne.s32.totalorder %s405, %s406
      %p420 = scmp.eq.s32.totalorder %s32, 1
      %p421 = por %p419, %p420
      %p423 = scmp.ne.s32.totalorder %s406, %s422
      %p424 = scmp.eq.s32.totalorder %s32, 0
      %p425 = por %p423, %p424
      %s426 = ssub.s32 %s34, %s41
      %p427 = scmp.eq.s32.totalorder %s426, 0
      %s429 = sadd.s32 %s428, 1
      %s430 = scalar_select %p427, %s428, %s429
      %p433 = pneg %p427
      %p434 = scmp.eq.s32.totalorder %s26, 1
      %p435 = por %p433, %p434
      %p436 = scmp.ne.s32.totalorder %s428, %s431
      %p437 = scmp.eq.s32.totalorder %s26, 0
      %p438 = por %p436, %p437
      %p439 = scmp.ne.s32.totalorder %s428, %s431
      %p440 = scmp.eq.s32.totalorder %s31, 1
      %p441 = por %p439, %p440
      %p442 = scmp.ne.s32.totalorder %s431, %s432
      %p443 = scmp.eq.s32.totalorder %s31, 0
      %p444 = por %p442, %p443
      %p445 = scmp.ne.s32.totalorder %s431, %s432
      %p446 = scmp.eq.s32.totalorder %s32, 1
      %p447 = por %p445, %p446
      %p449 = scmp.ne.s32.totalorder %s432, %s448
      %p450 = scmp.eq.s32.totalorder %s32, 0
      %p451 = por %p449, %p450
      %s452 = ssub.s32 %s33, %s45
      %p453 = scmp.eq.s32.totalorder %s452, 0
      %s455 = sadd.s32 %s454, 1
      %s456 = scalar_select %p453, %s454, %s455
      %p459 = pneg %p453
      %p460 = scmp.eq.s32.totalorder %s26, 1
      %p461 = por %p459, %p460
      %p462 = scmp.ne.s32.totalorder %s454, %s457
      %p463 = scmp.eq.s32.totalorder %s26, 0
      %p464 = por %p462, %p463
      %p465 = scmp.ne.s32.totalorder %s454, %s457
      %p466 = scmp.eq.s32.totalorder %s31, 1
      %p467 = por %p465, %p466
      %p468 = scmp.ne.s32.totalorder %s457, %s458
      %p469 = scmp.eq.s32.totalorder %s31, 0
      %p470 = por %p468, %p469
      %p471 = scmp.ne.s32.totalorder %s457, %s458
      %p472 = scmp.eq.s32.totalorder %s32, 1
      %p473 = por %p471, %p472
      %p475 = scmp.ne.s32.totalorder %s458, %s474
      %p476 = scmp.eq.s32.totalorder %s32, 0
      %p477 = por %p475, %p476
      %p478 = scmp.le.s32.totalorder 1, %s26
      %p479 = scmp.lt.s32.totalorder %s26, 3
      %p480 = pnand %p478, %p479
      %p481 = pneg %p480
      // Predicated region
      $region9: #{tpu_custom_call.1} parent=5 // pred_check
        _
      $region10: #{tpu_custom_call.1} parent=5 // pred_check_branch
        %483 = sbr.rel (%p480) target = $region12
      $region11: #{tpu_custom_call.1} parent=5 // pred_region
        %s484 = ssub.s32 %s26, 1
        // Predicated region
        $region13: #{tpu_custom_call.1} parent=11 // pred_check
          %p485 = pneg %p64
        $region14: #{tpu_custom_call.1} parent=11 // pred_check_branch
          %487 = sbr.rel (%p485) target = $region16
        $region15: #{tpu_custom_call.1} parent=11 // pred_region
          %s488 = smul.u32 2, %s35
          %s490 = ssub.s32 256, 256
          %491 = vsyncadd [#allocation3], %s490
          %s492 = smul.addr %s488, 128
          %s493 = scalar_lea.hbm %s0, %s492
          %s494 = sshll.u32 [#allocation2], 4
          %s495 = int_to_ptr.vmem [resolvable:$true] %s494
          %500 = dma.hbm_to_vmem [thread:$0]  %s493, 256, %s495, [#allocation3], 128, 128, 8
        $region16: #{tpu_custom_call.1} parent=11 // pred_fallthru
          _
        // Predicated region
        $region17: #{tpu_custom_call.1} parent=11 // pred_check
          %p501 = pneg %p90
        $region18: #{tpu_custom_call.1} parent=11 // pred_check_branch
          %503 = sbr.rel (%p501) target = $region20
        $region19: #{tpu_custom_call.1} parent=11 // pred_region
          %s504 = smul.u32 2, %s35
          %s506 = ssub.s32 32, 32
          %507 = vsyncadd [#allocation6], %s506
          %s508 = smul.addr %s504, 16
          %s509 = scalar_lea.hbm %s1, %s508
          %s510 = sshll.u32 [#allocation5], 4
          %s511 = int_to_ptr.vmem [resolvable:$true] %s510
          %516 = dma.hbm_to_vmem [thread:$0]  %s509, 32, %s511, [#allocation6], 16, 16, 1
        $region20: #{tpu_custom_call.1} parent=11 // pred_fallthru
          _
        // Predicated region
        $region21: #{tpu_custom_call.1} parent=11 // pred_check
          %p517 = pneg %p111
        $region22: #{tpu_custom_call.1} parent=11 // pred_check_branch
          %519 = sbr.rel (%p517) target = $region24
        $region23: #{tpu_custom_call.1} parent=11 // pred_region
          %s521 = ssub.s32 16, 16
          %522 = vsyncadd [#allocation6], %s521
          %s524 = sshll.u32 [#allocation7], 4
          %s525 = int_to_ptr.vmem [resolvable:$true] %s524
          %527 = dma.hbm_to_vmem [thread:$0]  %s2, 16, %s525, [#allocation6]
        $region24: #{tpu_custom_call.1} parent=11 // pred_fallthru
          _
        // Predicated region
        $region25: #{tpu_custom_call.1} parent=11 // pred_check
          %p528 = pneg %p132
        $region26: #{tpu_custom_call.1} parent=11 // pred_check_branch
          %530 = sbr.rel (%p528) target = $region28
        $region27: #{tpu_custom_call.1} parent=11 // pred_region
          %s532 = ssub.s32 16, 16
          %533 = vsyncadd [#allocation9], %s532
          %s535 = sshll.u32 [#allocation8], 4
          %s536 = int_to_ptr.vmem [resolvable:$true] %s535
          %538 = dma.hbm_to_vmem [thread:$0]  %s3, 16, %s536, [#allocation9]
        $region28: #{tpu_custom_call.1} parent=11 // pred_fallthru
          _
      $region12: #{tpu_custom_call.1} parent=5 // pred_fallthru
        _
      %p539 = scmp.lt.s32.totalorder %s26, 2
      // Predicated region
      $region29: #{tpu_custom_call.1} parent=5 // pred_check
        %p540 = pneg %p539
      $region30: #{tpu_custom_call.1} parent=5 // pred_check_branch
        %542 = sbr.rel (%p540) target = $region32
      $region31: #{tpu_custom_call.1} parent=5 // pred_region
        // Predicated region
        $region33: #{tpu_custom_call.1} parent=31 // pred_check
          %p543 = pneg %p152
        $region34: #{tpu_custom_call.1} parent=31 // pred_check_branch
          %545 = sbr.rel (%p543) target = $region36
        $region35: #{tpu_custom_call.1} parent=31 // pred_region
          %p546 = scmp.lt.s32.totalorder %s34, 1
          %s547 = scalar_select %p546, %s34, 1
          %s548 = smul.addr %s547, 4
          %s549 = smul.addr %s548, 4
          %s550 = scalar_lea.vmem %s4, %s549
        $region36: #{tpu_custom_call.1} parent=31 // pred_fallthru
          _
        // Predicated region
        $region37: #{tpu_custom_call.1} parent=31 // pred_check
          %p551 = pneg %p178
        $region38: #{tpu_custom_call.1} parent=31 // pred_check_branch
          %553 = sbr.rel (%p551) target = $region40
        $region39: #{tpu_custom_call.1} parent=31 // pred_region
          %p554 = scmp.lt.s32.totalorder %s34, 1
          %s555 = scalar_select %p554, %s34, 1
          %s556 = scalar_lea.vmem %s5, %s555
        $region40: #{tpu_custom_call.1} parent=31 // pred_fallthru
          _
        // Predicated region
        $region41: #{tpu_custom_call.1} parent=31 // pred_check
          %p557 = pneg %p204
        $region42: #{tpu_custom_call.1} parent=31 // pred_check_branch
          %559 = sbr.rel (%p557) target = $region44
        $region43: #{tpu_custom_call.1} parent=31 // pred_region
          %p560 = scmp.lt.s32.totalorder %s34, 1
          %s561 = scalar_select %p560, %s34, 1
          %s562 = smul.addr %s561, 4
          %s563 = smul.addr %s562, 4
          %s564 = scalar_lea.vmem %s6, %s563
        $region44: #{tpu_custom_call.1} parent=31 // pred_fallthru
          _
        // Predicated region
        $region45: #{tpu_custom_call.1} parent=31 // pred_check
          %p565 = pneg %p230
        $region46: #{tpu_custom_call.1} parent=31 // pred_check_branch
          %567 = sbr.rel (%p565) target = $region48
        $region47: #{tpu_custom_call.1} parent=31 // pred_region
          %p568 = scmp.lt.s32.totalorder %s34, 1
          %s569 = scalar_select %p568, %s34, 1
          %s570 = scalar_lea.vmem %s7, %s569
        $region48: #{tpu_custom_call.1} parent=31 // pred_fallthru
          _
        // Predicated region
        $region49: #{tpu_custom_call.1} parent=31 // pred_check
          %p571 = pneg %p256
        $region50: #{tpu_custom_call.1} parent=31 // pred_check_branch
          %573 = sbr.rel (%p571) target = $region52
        $region51: #{tpu_custom_call.1} parent=31 // pred_region
          %p574 = scmp.lt.s32.totalorder %s34, 1
          %s575 = scalar_select %p574, %s34, 1
          %s576 = scalar_lea.vmem %s8, %s575
        $region52: #{tpu_custom_call.1} parent=31 // pred_fallthru
          _
        // Predicated region
        $region53: #{tpu_custom_call.1} parent=31 // pred_check
          %p577 = pneg %p282
        $region54: #{tpu_custom_call.1} parent=31 // pred_check_branch
          %579 = sbr.rel (%p577) target = $region56
        $region55: #{tpu_custom_call.1} parent=31 // pred_region
          %p580 = scmp.lt.s32.totalorder %s34, 1
          %s581 = scalar_select %p580, %s34, 1
          %s582 = scalar_lea.vmem %s9, %s581
        $region56: #{tpu_custom_call.1} parent=31 // pred_fallthru
          _
        // Predicated region
        $region57: #{tpu_custom_call.1} parent=31 // pred_check
          %p583 = pneg %p308
        $region58: #{tpu_custom_call.1} parent=31 // pred_check_branch
          %585 = sbr.rel (%p583) target = $region60
        $region59: #{tpu_custom_call.1} parent=31 // pred_region
          %p586 = scmp.lt.s32.totalorder %s34, 1
          %s587 = scalar_select %p586, %s34, 1
          %s588 = smul.addr %s587, 4
          %s589 = smul.addr %s588, 4
          %s590 = scalar_lea.vmem %s10, %s589
        $region60: #{tpu_custom_call.1} parent=31 // pred_fallthru
          _
        // Predicated region
        $region61: #{tpu_custom_call.1} parent=31 // pred_check
          %p591 = pneg %p334
        $region62: #{tpu_custom_call.1} parent=31 // pred_check_branch
          %593 = sbr.rel (%p591) target = $region64
        $region63: #{tpu_custom_call.1} parent=31 // pred_region
          %p594 = scmp.lt.s32.totalorder %s34, 1
          %s595 = scalar_select %p594, %s34, 1
          %s596 = scalar_lea.vmem %s11, %s595
        $region64: #{tpu_custom_call.1} parent=31 // pred_fallthru
          _
        // Predicated region
        $region65: #{tpu_custom_call.1} parent=31 // pred_check
          %p597 = pneg %p360
        $region66: #{tpu_custom_call.1} parent=31 // pred_check_branch
          %599 = sbr.rel (%p597) target = $region68
        $region67: #{tpu_custom_call.1} parent=31 // pred_region
          %p600 = scmp.lt.s32.totalorder %s34, 1
          %s601 = scalar_select %p600, %s34, 1
          %s602 = smul.addr %s601, 8
          %s603 = smul.addr %s602, 4
          %s604 = scalar_lea.vmem %s12, %s603
        $region68: #{tpu_custom_call.1} parent=31 // pred_fallthru
          _
        // Predicated region
        $region69: #{tpu_custom_call.1} parent=31 // pred_check
          %p605 = pneg %p386
        $region70: #{tpu_custom_call.1} parent=31 // pred_check_branch
          %607 = sbr.rel (%p605) target = $region72
        $region71: #{tpu_custom_call.1} parent=31 // pred_region
          %p608 = scmp.lt.s32.totalorder %s34, 1
          %s609 = scalar_select %p608, %s34, 1
          %s610 = scalar_lea.vmem %s13, %s609
        $region72: #{tpu_custom_call.1} parent=31 // pred_fallthru
          _
        // Predicated region
        $region73: #{tpu_custom_call.1} parent=31 // pred_check
          %p611 = pneg %p412
        $region74: #{tpu_custom_call.1} parent=31 // pred_check_branch
          %613 = sbr.rel (%p611) target = $region76
        $region75: #{tpu_custom_call.1} parent=31 // pred_region
          %p614 = scmp.lt.s32.totalorder %s34, 1
          %s615 = scalar_select %p614, %s34, 1
          %s616 = scalar_lea.vmem %s14, %s615
        $region76: #{tpu_custom_call.1} parent=31 // pred_fallthru
          _
        // Predicated region
        $region77: #{tpu_custom_call.1} parent=31 // pred_check
          %p617 = pneg %p438
        $region78: #{tpu_custom_call.1} parent=31 // pred_check_branch
          %619 = sbr.rel (%p617) target = $region80
        $region79: #{tpu_custom_call.1} parent=31 // pred_region
          %p620 = scmp.lt.s32.totalorder %s34, 1
          %s621 = scalar_select %p620, %s34, 1
          %s622 = scalar_lea.vmem %s15, %s621
        $region80: #{tpu_custom_call.1} parent=31 // pred_fallthru
          _
      $region32: #{tpu_custom_call.1} parent=5 // pred_fallthru
        _
      %p623 = scmp.le.s32.totalorder 1, %s26
      %p624 = scmp.lt.s32.totalorder %s26, 3
      %p625 = pnand %p623, %p624
      %p626 = pneg %p625
      // Predicated region
      $region81: #{tpu_custom_call.1} parent=5 // pred_check
        _
      $region82: #{tpu_custom_call.1} parent=5 // pred_check_branch
        %628 = sbr.rel (%p625) target = $region84
      $region83: #{tpu_custom_call.1} parent=5 // pred_region
        %s629 = ssub.s32 %s26, 1
        // Predicated region
        $region85: #{tpu_custom_call.1} parent=83 // pred_check
          %p630 = pneg %p64
        $region86: #{tpu_custom_call.1} parent=83 // pred_check_branch
          %632 = sbr.rel (%p630) target = $region88
        $region87: #{tpu_custom_call.1} parent=83 // pred_region
          %633 = dma.done [#allocation3], 256
        $region88: #{tpu_custom_call.1} parent=83 // pred_fallthru
          _
        // Predicated region
        $region89: #{tpu_custom_call.1} parent=83 // pred_check
          %p634 = pneg %p90
        $region90: #{tpu_custom_call.1} parent=83 // pred_check_branch
          %636 = sbr.rel (%p634) target = $region92
        $region91: #{tpu_custom_call.1} parent=83 // pred_region
          %637 = dma.done [#allocation6], 32
        $region92: #{tpu_custom_call.1} parent=83 // pred_fallthru
          _
        // Predicated region
        $region93: #{tpu_custom_call.1} parent=83 // pred_check
          %p638 = pneg %p111
        $region94: #{tpu_custom_call.1} parent=83 // pred_check_branch
          %640 = sbr.rel (%p638) target = $region96
        $region95: #{tpu_custom_call.1} parent=83 // pred_region
          %641 = dma.done [#allocation6], 16
        $region96: #{tpu_custom_call.1} parent=83 // pred_fallthru
          _
        // Predicated region
        $region97: #{tpu_custom_call.1} parent=83 // pred_check
          %p642 = pneg %p132
        $region98: #{tpu_custom_call.1} parent=83 // pred_check_branch
          %644 = sbr.rel (%p642) target = $region100
        $region99: #{tpu_custom_call.1} parent=83 // pred_region
          %645 = dma.done [#allocation9], 16
        $region100: #{tpu_custom_call.1} parent=83 // pred_fallthru
          _
        %p646 = pneg %p64
        %p647 = pneg %p61
        %p648 = pneg %p90
        %p649 = pneg %p87
        %p650 = pneg %p111
        %p651 = pneg %p108
        %p652 = pneg %p132
        %p653 = pneg %p129
        %p654 = scmp.lt.s32.totalorder %s36, 1
        %s655 = scalar_select %p654, %s36, 1
        %s656 = smul.addr %s655, 4
        %s657 = smul.addr %s656, 4
        %s658 = scalar_lea.vmem %s4, %s657
        %p659 = pneg %p158
        %p660 = pneg %p155
        %p661 = scmp.lt.s32.totalorder %s36, 1
        %s662 = scalar_select %p661, %s36, 1
        %s663 = scalar_lea.vmem %s5, %s662
        %p664 = pneg %p184
        %p665 = pneg %p181
        %p666 = scmp.lt.s32.totalorder %s36, 1
        %s667 = scalar_select %p666, %s36, 1
        %s668 = smul.addr %s667, 4
        %s669 = smul.addr %s668, 4
        %s670 = scalar_lea.vmem %s6, %s669
        %p671 = pneg %p210
        %p672 = pneg %p207
        %p673 = scmp.lt.s32.totalorder %s36, 1
        %s674 = scalar_select %p673, %s36, 1
        %s675 = scalar_lea.vmem %s7, %s674
        %p676 = pneg %p236
        %p677 = pneg %p233
        %p678 = scmp.lt.s32.totalorder %s36, 1
        %s679 = scalar_select %p678, %s36, 1
        %s680 = scalar_lea.vmem %s8, %s679
        %p681 = pneg %p262
        %p682 = pneg %p259
        %p683 = scmp.lt.s32.totalorder %s36, 1
        %s684 = scalar_select %p683, %s36, 1
        %s685 = scalar_lea.vmem %s9, %s684
        %p686 = pneg %p288
        %p687 = pneg %p285
        %p688 = scmp.lt.s32.totalorder %s36, 1
        %s689 = scalar_select %p688, %s36, 1
        %s690 = smul.addr %s689, 4
        %s691 = smul.addr %s690, 4
        %s692 = scalar_lea.vmem %s10, %s691
        %p693 = pneg %p314
        %p694 = pneg %p311
        %p695 = scmp.lt.s32.totalorder %s36, 1
        %s696 = scalar_select %p695, %s36, 1
        %s697 = scalar_lea.vmem %s11, %s696
        %p698 = pneg %p340
        %p699 = pneg %p337
        %p700 = scmp.lt.s32.totalorder %s36, 1
        %s701 = scalar_select %p700, %s36, 1
        %s702 = smul.addr %s701, 8
        %s703 = smul.addr %s702, 4
        %s704 = scalar_lea.vmem %s12, %s703
        %p705 = pneg %p366
        %p706 = pneg %p363
        %p707 = scmp.lt.s32.totalorder %s36, 1
        %s708 = scalar_select %p707, %s36, 1
        %s709 = scalar_lea.vmem %s13, %s708
        %p710 = pneg %p392
        %p711 = pneg %p389
        %p712 = scmp.lt.s32.totalorder %s36, 1
        %s713 = scalar_select %p712, %s36, 1
        %s714 = scalar_lea.vmem %s14, %s713
        %p715 = pneg %p418
        %p716 = pneg %p415
        %p717 = scmp.lt.s32.totalorder %s36, 1
        %s718 = scalar_select %p717, %s36, 1
        %s719 = scalar_lea.vmem %s15, %s718
        %p720 = pneg %p444
        %p721 = pneg %p441
        %p722 = pneg %p470
        %p723 = pneg %p467
        %s724 = smul.u32 2, %s35
        %s725 = smul.u32 2, %s35
        %p726 = scmp.lt.s32.totalorder %s36, 1
        %s727 = scalar_select %p726, %s36, 1
        %s728 = smul.addr %s727, 4
        %s729 = smul.addr %s728, 4
        %s730 = scalar_lea.vmem %s4, %s729
        %p731 = scmp.lt.s32.totalorder %s36, 1
        %s732 = scalar_select %p731, %s36, 1
        %s733 = scalar_lea.vmem %s5, %s732
        %p734 = scmp.lt.s32.totalorder %s36, 1
        %s735 = scalar_select %p734, %s36, 1
        %s736 = smul.addr %s735, 4
        %s737 = smul.addr %s736, 4
        %s738 = scalar_lea.vmem %s6, %s737
        %p739 = scmp.lt.s32.totalorder %s36, 1
        %s740 = scalar_select %p739, %s36, 1
        %s741 = scalar_lea.vmem %s7, %s740
        %p742 = scmp.lt.s32.totalorder %s36, 1
        %s743 = scalar_select %p742, %s36, 1
        %s744 = scalar_lea.vmem %s8, %s743
        %p745 = scmp.lt.s32.totalorder %s36, 1
        %s746 = scalar_select %p745, %s36, 1
        %s747 = scalar_lea.vmem %s9, %s746
        %p748 = scmp.lt.s32.totalorder %s36, 1
        %s749 = scalar_select %p748, %s36, 1
        %s750 = smul.addr %s749, 4
        %s751 = smul.addr %s750, 4
        %s752 = scalar_lea.vmem %s10, %s751
        %p753 = scmp.lt.s32.totalorder %s36, 1
        %s754 = scalar_select %p753, %s36, 1
        %s755 = scalar_lea.vmem %s11, %s754
        %p756 = scmp.lt.s32.totalorder %s36, 1
        %s757 = scalar_select %p756, %s36, 1
        %s758 = smul.addr %s757, 8
        %s759 = smul.addr %s758, 4
        %s760 = scalar_lea.vmem %s12, %s759
        %p761 = scmp.lt.s32.totalorder %s36, 1
        %s762 = scalar_select %p761, %s36, 1
        %s763 = scalar_lea.vmem %s13, %s762
        %p764 = scmp.lt.s32.totalorder %s36, 1
        %s765 = scalar_select %p764, %s36, 1
        %s766 = scalar_lea.vmem %s14, %s765
        %p767 = scmp.lt.s32.totalorder %s36, 1
        %s768 = scalar_select %p767, %s36, 1
        %s769 = scalar_lea.vmem %s15, %s768
        %s770 = smul.u32 2, %s35
        %p772 = scmp.eq.s32.totalorder %s36, 0
        // Predicated region
        $region101: #{tpu_custom_call.1} parent=83 // pred_check
          %p773 = pneg %p772
        $region102: #{tpu_custom_call.1} parent=83 // pred_check_branch
          %775 = sbr.rel (%p773) target = $region104
        $region103: #{tpu_custom_call.1} parent=83 // pred_region
          %v776 = vld [vmem:[#allocation2] sm:$0xff]
          %v777 = vld [vmem:[#allocation2 + $0x8] sm:$0xff]
          %v778 = vld [vmem:[#allocation7] sm:$0x1]
          %v779 = vld [vmem:[#allocation8] sm:$0x1]
          %vm780 = vcmask 261120
          %v781 = vsel %vm780, %v776, 0.0
          %782 = vadd.xlane.f32.xlu0 %v781
          %v783 = vpop.xlane.xlu0 %782
          %v784 = vsel %vm780, %v777, 0.0
          %785 = vadd.xlane.f32.xlu0 %v784
          %v786 = vpop.xlane.xlu0 %785
          %v787 = vrcp.pop 32.0
          %v788 = vmul.f32 %v783, %v787
          %v789 = vmul.f32 %v786, %v787
          %v790 = vsub.f32 %v776, %v788
          %v791 = vsub.f32 %v777, %v789
          %v792 = vmul.f32 %v790, %v790
          %v793 = vmul.f32 %v791, %v791
          %v794 = vsel %vm780, %v792, 0.0
          %795 = vadd.xlane.f32.xlu0 %v794
          %v796 = vpop.xlane.xlu0 %795
          %v797 = vsel %vm780, %v793, 0.0
          %798 = vadd.xlane.f32.xlu0 %v797
          %v799 = vpop.xlane.xlu0 %798
          %v800 = vmul.f32 %v796, %v787
          %v801 = vmul.f32 %v799, %v787
          %v802 = vadd.f32 %v800, 1e-12
          %v803 = vadd.f32 %v801, 1e-12
          %v804 = vrsqrt.pop %v802
          %v805 = vrsqrt.pop %v803
          %v806 = vmul.f32 %v790, %v804
          %v807 = vmul.f32 %v791, %v805
          %v809 = vlaneseq
          %v810 = vshrl.u32 %v809, 7
          %v811 = vsub.s32 0, %v810
          %v812 = vrot.slane %v778, %v811
          %v814 = vmul.f32 %v806, %v812
          %v815 = vmul.f32 %v807, %v812
          %v817 = vlaneseq
          %v818 = vshrl.u32 %v817, 7
          %v819 = vsub.s32 0, %v818
          %v820 = vrot.slane %v779, %v819
          %v822 = vadd.f32 %v814, %v820
          %v823 = vadd.f32 %v815, %v820
          %824 = vst.msk [vmem:[#allocation10] sm:$0xff] %vm780, %v822
          %825 = vst.msk [vmem:[#allocation10 + $0x8] sm:$0xff] %vm780, %v823
        $region104: #{tpu_custom_call.1} parent=83 // pred_fallthru
          _
        %v826 = vld [vmem:[#allocation10] sm:$0xff]
        %v827 = vld [vmem:[#allocation10 + $0x8] sm:$0xff]
        %v828 = vpack.c.bf16 %v827, %v826
        %v829 = vld [vmem:[%s730] sm:$0xf]
        %v830 = vld [vmem:[%s730 + $0x4] sm:$0xf]
        %v831 = vld [vmem:[%s730 + $0x8] sm:$0xf]
        %v832 = vld [vmem:[%s730 + $0xc] sm:$0xf]
        %v833 = vld [vmem:[%s733] sm:$0x1]
        %v835 = vlaneseq
        %v836 = vshrl.u32 %v835, 7
        %v837 = vsub.s32 0, %v836
        %v838 = vrot.slane %v833, %v837
        %v844 = vunpack.c.l.b16 %v829
        %v845 = vunpack.c.l.b16 %v830
        %v846 = vunpack.c.l.b16 %v831
        %v847 = vunpack.c.l.b16 %v832
        %v848 = vpack.c.b16 %v845, %v844
        %v849 = vpack.c.b16 %v847, %v846
        %vm852 = vcmask 261120
        %v854 = vsel %vm852, %v828, 0
        %856 = vmatprep.subr.bf16.mxu0 0
        %857 = vmatpush1.bf16.msra.mxu0 0
        %858 = vmatprep.subr.bf16.mxu0 0
        %859 = vmatpush1.bf16.msra.mxu0 0
        %860 = vmatprep.subr.bf16.mxu0 0
        %861 = vmatpush1.bf16.msra.mxu0 0
        %862 = vmatprep.subr.bf16.mxu0 0
        %863 = vmatpush1.bf16.msra.mxu0 0
        %864 = vmatprep.subr.bf16.mxu0 0
        %865 = vmatpush1.bf16.msra.mxu0 0
        %866 = vmatprep.subr.bf16.mxu0 0
        %867 = vmatpush1.bf16.msra.mxu0 0
        %868 = vmatprep.subr.bf16.mxu0 0
        %869 = vmatpush1.bf16.msra.mxu0 %v849
        %870 = vmatprep.subr.bf16.mxu0 0
        %871 = vmatpush1.bf16.msra.mxu0 %v848
        %872 = vmatprep.subr.bf16.mxu0 0
        %873 = vmatpush2.bf16.msra.mxu0 0
        %874 = vmatprep.subr.bf16.mxu0 0
        %875 = vmatpush2.bf16.msra.mxu0 0
        %876 = vmatprep.subr.bf16.mxu0 0
        %877 = vmatpush2.bf16.msra.mxu0 0
        %878 = vmatprep.subr.bf16.mxu0 0
        %879 = vmatpush2.bf16.msra.mxu0 0
        %880 = vmatprep.subr.bf16.mxu0 0
        %881 = vmatpush2.bf16.msra.mxu0 0
        %882 = vmatprep.subr.bf16.mxu0 0
        %883 = vmatpush2.bf16.msra.mxu0 0
        %884 = vmatprep.subr.bf16.mxu0 0
        %885 = vmatpush2.bf16.msra.mxu0 0
        %886 = vmatprep.subr.bf16.mxu0 0
        %887 = vmatpush2.bf16.msra.mxu0 0
        %888 = vmatprep.mubr.bf16.mxu0 0
        %889 = vmatmul.mubr.bf16.gmra.mxu0 %v854
        %v890 = vpop.f32.mrf.mxu0
        %v891 = vadd.f32 %v838, %v890
        %v892 = vpop.f32.mrf.mxu0
        %v893 = vpop.f32.mrf.mxu0
        %v894 = vadd.f32 %v838, %v893
        %v895 = vpop.f32.mrf.mxu0
        %896 = vdwg.mxu0
        %v897 = vpack.c.bf16 %v894, %v891
        %v899 = vunpack.c.l.b16 %v897
        %v900 = vunpack.c.h.b16 %v897
        %v901 = vpack.c.b16 %v899, %v899
        %v902 = vpack.c.b16 %v900, %v900
        %v903 = vld [vmem:[#allocation5] sm:$0x1]
        %v904 = vld [vmem:[#allocation5 + $0x1] sm:$0x1]
        %v905 = vld [vmem:[%s738] sm:$0xf]
        %v906 = vld [vmem:[%s738 + $0x4] sm:$0xf]
        %v907 = vld [vmem:[%s738 + $0x8] sm:$0xf]
        %v908 = vld [vmem:[%s738 + $0xc] sm:$0xf]
        %909 = vrot.lane.b32.xlu0 %v901, 96
        %v910 = vpop.permute.xlu0 %909
        %vm911 = vcmask 64512
        %v913 = vsel %vm911, %v901, 0
        %v916 = vsel %vm911, %v910, 0
        %918 = vmatprep.subr.bf16.mxu0 0
        %919 = vmatpush1.bf16.xpose.msra.mxu0 0
        %920 = vmatprep.subr.bf16.mxu0 0
        %921 = vmatpush1.bf16.xpose.msra.mxu0 0
        %922 = vmatprep.subr.bf16.mxu0 0
        %923 = vmatpush1.bf16.xpose.msra.mxu0 0
        %924 = vmatprep.subr.bf16.mxu0 0
        %925 = vmatpush1.bf16.xpose.msra.mxu0 0
        %926 = vmatprep.subr.bf16.mxu0 0
        %927 = vmatpush1.bf16.xpose.msra.mxu0 0
        %928 = vmatprep.subr.bf16.mxu0 0
        %929 = vmatpush1.bf16.xpose.msra.mxu0 0
        %930 = vmatprep.subr.bf16.mxu0 0
        %931 = vmatpush1.bf16.xpose.msra.mxu0 0
        %932 = vmatprep.subr.bf16.mxu0 0
        %933 = vmatpush1.bf16.xpose.msra.mxu0 %v916
        %934 = vmatprep.subr.bf16.mxu0 0
        %935 = vmatpush2.bf16.xpose.msra.mxu0 0
        %936 = vmatprep.subr.bf16.mxu0 0
        %937 = vmatpush2.bf16.xpose.msra.mxu0 0
        %938 = vmatprep.subr.bf16.mxu0 0
        %939 = vmatpush2.bf16.xpose.msra.mxu0 0
        %940 = vmatprep.subr.bf16.mxu0 0
        %941 = vmatpush2.bf16.xpose.msra.mxu0 0
        %942 = vmatprep.subr.bf16.mxu0 0
        %943 = vmatpush2.bf16.xpose.msra.mxu0 0
        %944 = vmatprep.subr.bf16.mxu0 0
        %945 = vmatpush2.bf16.xpose.msra.mxu0 0
        %946 = vmatprep.subr.bf16.mxu0 0
        %947 = vmatpush2.bf16.xpose.msra.mxu0 0
        %948 = vmatprep.subr.bf16.mxu0 0
        %949 = vmatpush2.bf16.xpose.msra.mxu0 0
        %950 = vmatprep.mubr.bf16.mxu0 0
        %951 = vmatmul.mubr.bf16.gmra.mxu0 %v913
        %v952 = vpop.f32.mrf.mxu0
        %v953 = vadd.f32 0.0, %v952
        %v954 = vpop.f32.mrf.mxu0
        %v955 = vpop.f32.mrf.mxu0
        %v956 = vpop.f32.mrf.mxu0
        %957 = vdwg.mxu0
        %958 = vrot.lane.b32.xlu0 %v902, 96
        %v959 = vpop.permute.xlu0 %958
        %v961 = vsel %vm911, %v902, 0
        %v964 = vsel %vm911, %v959, 0
        %966 = vmatprep.subr.bf16.mxu0 0
        %967 = vmatpush1.bf16.xpose.msra.mxu0 0
        %968 = vmatprep.subr.bf16.mxu0 0
        %969 = vmatpush1.bf16.xpose.msra.mxu0 0
        %970 = vmatprep.subr.bf16.mxu0 0
        %971 = vmatpush1.bf16.xpose.msra.mxu0 0
        %972 = vmatprep.subr.bf16.mxu0 0
        %973 = vmatpush1.bf16.xpose.msra.mxu0 0
        %974 = vmatprep.subr.bf16.mxu0 0
        %975 = vmatpush1.bf16.xpose.msra.mxu0 0
        %976 = vmatprep.subr.bf16.mxu0 0
        %977 = vmatpush1.bf16.xpose.msra.mxu0 0
        %978 = vmatprep.subr.bf16.mxu0 0
        %979 = vmatpush1.bf16.xpose.msra.mxu0 0
        %980 = vmatprep.subr.bf16.mxu0 0
        %981 = vmatpush1.bf16.xpose.msra.mxu0 %v964
        %982 = vmatprep.subr.bf16.mxu0 0
        %983 = vmatpush2.bf16.xpose.msra.mxu0 0
        %984 = vmatprep.subr.bf16.mxu0 0
        %985 = vmatpush2.bf16.xpose.msra.mxu0 0
        %986 = vmatprep.subr.bf16.mxu0 0
        %987 = vmatpush2.bf16.xpose.msra.mxu0 0
        %988 = vmatprep.subr.bf16.mxu0 0
        %989 = vmatpush2.bf16.xpose.msra.mxu0 0
        %990 = vmatprep.subr.bf16.mxu0 0
        %991 = vmatpush2.bf16.xpose.msra.mxu0 0
        %992 = vmatprep.subr.bf16.mxu0 0
        %993 = vmatpush2.bf16.xpose.msra.mxu0 0
        %994 = vmatprep.subr.bf16.mxu0 0
        %995 = vmatpush2.bf16.xpose.msra.mxu0 0
        %996 = vmatprep.subr.bf16.mxu0 0
        %997 = vmatpush2.bf16.xpose.msra.mxu0 0
        %998 = vmatprep.mubr.bf16.mxu0 0
        %999 = vmatmul.mubr.bf16.gmra.mxu0 %v961
        %v1000 = vpop.f32.mrf.mxu0
        %v1001 = vadd.f32 0.0, %v1000
        %v1002 = vpop.f32.mrf.mxu0
        %v1003 = vpop.f32.mrf.mxu0
        %v1004 = vpop.f32.mrf.mxu0
        %1005 = vdwg.mxu0
        %v1006 = vmul.f32 %v953, 0.35355338
        %v1007 = vmul.f32 %v1001, 0.35355338
        %v1010 = vlaneseq
        %v1011 = vshrl.u32 %v1010, 7
        %v1012 = vsub.s32 0, %v1011
        %v1013 = vrot.slane %v903, %v1012
        %v1014 = vlaneseq
        %v1015 = vshrl.u32 %v1014, 7
        %v1016 = vsub.s32 0, %v1015
        %v1017 = vrot.slane %v904, %v1016
        %v1020 = vadd.f32 %v1006, %v1013
        %v1021 = vadd.f32 %v1007, %v1017
        %v1022 = vsel %vm911, %v1020, -inf
        %1023 = vmax.xlane.f32.xlu0 %v1022
        %v1024 = vpop.xlane.xlu0 %1023
        %v1025 = vsel %vm911, %v1021, -inf
        %1026 = vmax.xlane.f32.xlu0 %v1025
        %v1027 = vpop.xlane.xlu0 %1026
        %v1028 = vsub.f32 %v1020, %v1024
        %v1029 = vsub.f32 %v1021, %v1027
        %v1030 = vmul.f32 %v1028, 1.442695
        %v1031 = vpow.pop %v1030
        %v1032 = vmul.f32 %v1029, 1.442695
        %v1033 = vpow.pop %v1032
        %v1034 = vsel %vm911, %v1031, 0.0
        %1035 = vadd.xlane.f32.xlu0 %v1034
        %v1036 = vpop.xlane.xlu0 %1035
        %v1037 = vsel %vm911, %v1033, 0.0
        %1038 = vadd.xlane.f32.xlu0 %v1037
        %v1039 = vpop.xlane.xlu0 %1038
        %v1040 = vrcp.pop %v1036
        %v1041 = vrcp.pop %v1039
        %v1042 = vmul.f32 %v1031, %v1040
        %v1043 = vmul.f32 %v1033, %v1041
        %v1044 = vpack.c.bf16 %v1042, %v1042
        %v1045 = vpack.c.bf16 %v1043, %v1043
        %1046 = vrot.lane.b32.xlu0 %v901, 64
        %v1047 = vpop.permute.xlu0 %1046
        %v1049 = vsel %vm911, %v1044, 0
        %vm1051 = vcmask 1043456
        %v1053 = vsel %vm1051, %v1047, 0
        %1055 = vmatprep.subr.bf16.mxu0 0
        %1056 = vmatpush1.bf16.msra.mxu0 0
        %1057 = vmatprep.subr.bf16.mxu0 0
        %1058 = vmatpush1.bf16.msra.mxu0 0
        %1059 = vmatprep.subr.bf16.mxu0 0
        %1060 = vmatpush1.bf16.msra.mxu0 0
        %1061 = vmatprep.subr.bf16.mxu0 0
        %1062 = vmatpush1.bf16.msra.mxu0 0
        %1063 = vmatprep.subr.bf16.mxu0 0
        %1064 = vmatpush1.bf16.msra.mxu0 0
        %1065 = vmatprep.subr.bf16.mxu0 0
        %1066 = vmatpush1.bf16.msra.mxu0 0
        %1067 = vmatprep.subr.bf16.mxu0 0
        %1068 = vmatpush1.bf16.msra.mxu0 0
        %1069 = vmatprep.subr.bf16.mxu0 0
        %1070 = vmatpush1.bf16.msra.mxu0 %v1053
        %1071 = vmatprep.subr.bf16.mxu0 0
        %1072 = vmatpush2.bf16.msra.mxu0 0
        %1073 = vmatprep.subr.bf16.mxu0 0
        %1074 = vmatpush2.bf16.msra.mxu0 0
        %1075 = vmatprep.subr.bf16.mxu0 0
        %1076 = vmatpush2.bf16.msra.mxu0 0
        %1077 = vmatprep.subr.bf16.mxu0 0
        %1078 = vmatpush2.bf16.msra.mxu0 0
        %1079 = vmatprep.subr.bf16.mxu0 0
        %1080 = vmatpush2.bf16.msra.mxu0 0
        %1081 = vmatprep.subr.bf16.mxu0 0
        %1082 = vmatpush2.bf16.msra.mxu0 0
        %1083 = vmatprep.subr.bf16.mxu0 0
        %1084 = vmatpush2.bf16.msra.mxu0 0
        %1085 = vmatprep.subr.bf16.mxu0 0
        %1086 = vmatpush2.bf16.msra.mxu0 0
        %1087 = vmatprep.mubr.bf16.mxu0 0
        %1088 = vmatmul.mubr.bf16.gmra.mxu0 %v1049
        %v1089 = vpop.f32.mrf.mxu0
        %v1090 = vadd.f32 0.0, %v1089
        %v1091 = vpop.f32.mrf.mxu0
        %v1092 = vpop.f32.mrf.mxu0
        %v1093 = vpop.f32.mrf.mxu0
        %1094 = vdwg.mxu0
        %1095 = vrot.lane.b32.xlu0 %v902, 64
        %v1096 = vpop.permute.xlu0 %1095
        %v1098 = vsel %vm911, %v1045, 0
        %v1101 = vsel %vm1051, %v1096, 0
        %1103 = vmatprep.subr.bf16.mxu0 0
        %1104 = vmatpush1.bf16.msra.mxu0 0
        %1105 = vmatprep.subr.bf16.mxu0 0
        %1106 = vmatpush1.bf16.msra.mxu0 0
        %1107 = vmatprep.subr.bf16.mxu0 0
        %1108 = vmatpush1.bf16.msra.mxu0 0
        %1109 = vmatprep.subr.bf16.mxu0 0
        %1110 = vmatpush1.bf16.msra.mxu0 0
        %1111 = vmatprep.subr.bf16.mxu0 0
        %1112 = vmatpush1.bf16.msra.mxu0 0
        %1113 = vmatprep.subr.bf16.mxu0 0
        %1114 = vmatpush1.bf16.msra.mxu0 0
        %1115 = vmatprep.subr.bf16.mxu0 0
        %1116 = vmatpush1.bf16.msra.mxu0 0
        %1117 = vmatprep.subr.bf16.mxu0 0
        %1118 = vmatpush1.bf16.msra.mxu0 %v1101
        %1119 = vmatprep.subr.bf16.mxu0 0
        %1120 = vmatpush2.bf16.msra.mxu0 0
        %1121 = vmatprep.subr.bf16.mxu0 0
        %1122 = vmatpush2.bf16.msra.mxu0 0
        %1123 = vmatprep.subr.bf16.mxu0 0
        %1124 = vmatpush2.bf16.msra.mxu0 0
        %1125 = vmatprep.subr.bf16.mxu0 0
        %1126 = vmatpush2.bf16.msra.mxu0 0
        %1127 = vmatprep.subr.bf16.mxu0 0
        %1128 = vmatpush2.bf16.msra.mxu0 0
        %1129 = vmatprep.subr.bf16.mxu0 0
        %1130 = vmatpush2.bf16.msra.mxu0 0
        %1131 = vmatprep.subr.bf16.mxu0 0
        %1132 = vmatpush2.bf16.msra.mxu0 0
        %1133 = vmatprep.subr.bf16.mxu0 0
        %1134 = vmatpush2.bf16.msra.mxu0 0
        %1135 = vmatprep.mubr.bf16.mxu0 0
        %1136 = vmatmul.mubr.bf16.gmra.mxu0 %v1098
        %v1137 = vpop.f32.mrf.mxu0
        %v1138 = vadd.f32 0.0, %v1137
        %v1139 = vpop.f32.mrf.mxu0
        %v1140 = vpop.f32.mrf.mxu0
        %v1141 = vpop.f32.mrf.mxu0
        %1142 = vdwg.mxu0
        %v1143 = vpack.c.bf16 %v1138, %v1090
        %1144 = vrot.lane.b32.xlu0 %v901, 120
        %v1145 = vpop.permute.xlu0 %1144
        %1146 = vrot.lane.b32.xlu0 %v901, 88
        %v1147 = vpop.permute.xlu0 %1146
        %v1149 = vsel %vm911, %v1145, 0
        %v1152 = vsel %vm911, %v1147, 0
        %1154 = vmatprep.subr.bf16.mxu0 0
        %1155 = vmatpush1.bf16.xpose.msra.mxu0 0
        %1156 = vmatprep.subr.bf16.mxu0 0
        %1157 = vmatpush1.bf16.xpose.msra.mxu0 0
        %1158 = vmatprep.subr.bf16.mxu0 0
        %1159 = vmatpush1.bf16.xpose.msra.mxu0 0
        %1160 = vmatprep.subr.bf16.mxu0 0
        %1161 = vmatpush1.bf16.xpose.msra.mxu0 0
        %1162 = vmatprep.subr.bf16.mxu0 0
        %1163 = vmatpush1.bf16.xpose.msra.mxu0 0
        %1164 = vmatprep.subr.bf16.mxu0 0
        %1165 = vmatpush1.bf16.xpose.msra.mxu0 0
        %1166 = vmatprep.subr.bf16.mxu0 0
        %1167 = vmatpush1.bf16.xpose.msra.mxu0 0
        %1168 = vmatprep.subr.bf16.mxu0 0
        %1169 = vmatpush1.bf16.xpose.msra.mxu0 %v1152
        %1170 = vmatprep.subr.bf16.mxu0 0
        %1171 = vmatpush2.bf16.xpose.msra.mxu0 0
        %1172 = vmatprep.subr.bf16.mxu0 0
        %1173 = vmatpush2.bf16.xpose.msra.mxu0 0
        %1174 = vmatprep.subr.bf16.mxu0 0
        %1175 = vmatpush2.bf16.xpose.msra.mxu0 0
        %1176 = vmatprep.subr.bf16.mxu0 0
        %1177 = vmatpush2.bf16.xpose.msra.mxu0 0
        %1178 = vmatprep.subr.bf16.mxu0 0
        %1179 = vmatpush2.bf16.xpose.msra.mxu0 0
        %1180 = vmatprep.subr.bf16.mxu0 0
        %1181 = vmatpush2.bf16.xpose.msra.mxu0 0
        %1182 = vmatprep.subr.bf16.mxu0 0
        %1183 = vmatpush2.bf16.xpose.msra.mxu0 0
        %1184 = vmatprep.subr.bf16.mxu0 0
        %1185 = vmatpush2.bf16.xpose.msra.mxu0 0
        %1186 = vmatprep.mubr.bf16.mxu0 0
        %1187 = vmatmul.mubr.bf16.gmra.mxu0 %v1149
        %v1188 = vpop.f32.mrf.mxu0
        %v1189 = vadd.f32 0.0, %v1188
        %v1190 = vpop.f32.mrf.mxu0
        %v1191 = vpop.f32.mrf.mxu0
        %v1192 = vpop.f32.mrf.mxu0
        %1193 = vdwg.mxu0
        %1194 = vrot.lane.b32.xlu0 %v902, 120
        %v1195 = vpop.permute.xlu0 %1194
        %1196 = vrot.lane.b32.xlu0 %v902, 88
        %v1197 = vpop.permute.xlu0 %1196
        %v1199 = vsel %vm911, %v1195, 0
        %v1202 = vsel %vm911, %v1197, 0
        %1204 = vmatprep.subr.bf16.mxu0 0
        %1205 = vmatpush1.bf16.xpose.msra.mxu0 0
        %1206 = vmatprep.subr.bf16.mxu0 0
        %1207 = vmatpush1.bf16.xpose.msra.mxu0 0
        %1208 = vmatprep.subr.bf16.mxu0 0
        %1209 = vmatpush1.bf16.xpose.msra.mxu0 0
        %1210 = vmatprep.subr.bf16.mxu0 0
        %1211 = vmatpush1.bf16.xpose.msra.mxu0 0
        %1212 = vmatprep.subr.bf16.mxu0 0
        %1213 = vmatpush1.bf16.xpose.msra.mxu0 0
        %1214 = vmatprep.subr.bf16.mxu0 0
        %1215 = vmatpush1.bf16.xpose.msra.mxu0 0
        %1216 = vmatprep.subr.bf16.mxu0 0
        %1217 = vmatpush1.bf16.xpose.msra.mxu0 0
        %1218 = vmatprep.subr.bf16.mxu0 0
        %1219 = vmatpush1.bf16.xpose.msra.mxu0 %v1202
        %1220 = vmatprep.subr.bf16.mxu0 0
        %1221 = vmatpush2.bf16.xpose.msra.mxu0 0
        %1222 = vmatprep.subr.bf16.mxu0 0
        %1223 = vmatpush2.bf16.xpose.msra.mxu0 0
        %1224 = vmatprep.subr.bf16.mxu0 0
        %1225 = vmatpush2.bf16.xpose.msra.mxu0 0
        %1226 = vmatprep.subr.bf16.mxu0 0
        %1227 = vmatpush2.bf16.xpose.msra.mxu0 0
        %1228 = vmatprep.subr.bf16.mxu0 0
        %1229 = vmatpush2.bf16.xpose.msra.mxu0 0
        %1230 = vmatprep.subr.bf16.mxu0 0
        %1231 = vmatpush2.bf16.xpose.msra.mxu0 0
        %1232 = vmatprep.subr.bf16.mxu0 0
        %1233 = vmatpush2.bf16.xpose.msra.mxu0 0
        %1234 = vmatprep.subr.bf16.mxu0 0
        %1235 = vmatpush2.bf16.xpose.msra.mxu0 0
        %1236 = vmatprep.mubr.bf16.mxu0 0
        %1237 = vmatmul.mubr.bf16.gmra.mxu0 %v1199
        %v1238 = vpop.f32.mrf.mxu0
        %v1239 = vadd.f32 0.0, %v1238
        %v1240 = vpop.f32.mrf.mxu0
        %v1241 = vpop.f32.mrf.mxu0
        %v1242 = vpop.f32.mrf.mxu0
        %1243 = vdwg.mxu0
        %v1244 = vmul.f32 %v1189, 0.35355338
        %v1245 = vmul.f32 %v1239, 0.35355338
        %v1246 = vadd.f32 %v1244, %v1013
        %v1247 = vadd.f32 %v1245, %v1017
        %v1248 = vsel %vm911, %v1246, -inf
        %1249 = vmax.xlane.f32.xlu0 %v1248
        %v1250 = vpop.xlane.xlu0 %1249
        %v1251 = vsel %vm911, %v1247, -inf
        %1252 = vmax.xlane.f32.xlu0 %v1251
        %v1253 = vpop.xlane.xlu0 %1252
        %v1254 = vsub.f32 %v1246, %v1250
        %v1255 = vsub.f32 %v1247, %v1253
        %v1256 = vmul.f32 %v1254, 1.442695
        %v1257 = vpow.pop %v1256
        %v1258 = vmul.f32 %v1255, 1.442695
        %v1259 = vpow.pop %v1258
        %v1260 = vsel %vm911, %v1257, 0.0
        %1261 = vadd.xlane.f32.xlu0 %v1260
        %v1262 = vpop.xlane.xlu0 %1261
        %v1263 = vsel %vm911, %v1259, 0.0
        %1264 = vadd.xlane.f32.xlu0 %v1263
        %v1265 = vpop.xlane.xlu0 %1264
        %v1266 = vrcp.pop %v1262
        %v1267 = vrcp.pop %v1265
        %v1268 = vmul.f32 %v1257, %v1266
        %v1269 = vmul.f32 %v1259, %v1267
        %v1270 = vpack.c.bf16 %v1268, %v1268
        %v1271 = vpack.c.bf16 %v1269, %v1269
        %1272 = vrot.lane.b32.xlu0 %v901, 56
        %v1273 = vpop.permute.xlu0 %1272
        %v1275 = vsel %vm911, %v1270, 0
        %v1278 = vsel %vm1051, %v1273, 0
        %1280 = vmatprep.subr.bf16.mxu0 0
        %1281 = vmatpush1.bf16.msra.mxu0 0
        %1282 = vmatprep.subr.bf16.mxu0 0
        %1283 = vmatpush1.bf16.msra.mxu0 0
        %1284 = vmatprep.subr.bf16.mxu0 0
        %1285 = vmatpush1.bf16.msra.mxu0 0
        %1286 = vmatprep.subr.bf16.mxu0 0
        %1287 = vmatpush1.bf16.msra.mxu0 0
        %1288 = vmatprep.subr.bf16.mxu0 0
        %1289 = vmatpush1.bf16.msra.mxu0 0
        %1290 = vmatprep.subr.bf16.mxu0 0
        %1291 = vmatpush1.bf16.msra.mxu0 0
        %1292 = vmatprep.subr.bf16.mxu0 0
        %1293 = vmatpush1.bf16.msra.mxu0 0
        %1294 = vmatprep.subr.bf16.mxu0 0
        %1295 = vmatpush1.bf16.msra.mxu0 %v1278
        %1296 = vmatprep.subr.bf16.mxu0 0
        %1297 = vmatpush2.bf16.msra.mxu0 0
        %1298 = vmatprep.subr.bf16.mxu0 0
        %1299 = vmatpush2.bf16.msra.mxu0 0
        %1300 = vmatprep.subr.bf16.mxu0 0
        %1301 = vmatpush2.bf16.msra.mxu0 0
        %1302 = vmatprep.subr.bf16.mxu0 0
        %1303 = vmatpush2.bf16.msra.mxu0 0
        %1304 = vmatprep.subr.bf16.mxu0 0
        %1305 = vmatpush2.bf16.msra.mxu0 0
        %1306 = vmatprep.subr.bf16.mxu0 0
        %1307 = vmatpush2.bf16.msra.mxu0 0
        %1308 = vmatprep.subr.bf16.mxu0 0
        %1309 = vmatpush2.bf16.msra.mxu0 0
        %1310 = vmatprep.subr.bf16.mxu0 0
        %1311 = vmatpush2.bf16.msra.mxu0 0
        %1312 = vmatprep.mubr.bf16.mxu0 0
        %1313 = vmatmul.mubr.bf16.gmra.mxu0 %v1275
        %v1314 = vpop.f32.mrf.mxu0
        %v1315 = vadd.f32 0.0, %v1314
        %v1316 = vpop.f32.mrf.mxu0
        %v1317 = vpop.f32.mrf.mxu0
        %v1318 = vpop.f32.mrf.mxu0
        %1319 = vdwg.mxu0
        %1320 = vrot.lane.b32.xlu0 %v902, 56
        %v1321 = vpop.permute.xlu0 %1320
        %v1323 = vsel %vm911, %v1271, 0
        %v1326 = vsel %vm1051, %v1321, 0
        %1328 = vmatprep.subr.bf16.mxu0 0
        %1329 = vmatpush1.bf16.msra.mxu0 0
        %1330 = vmatprep.subr.bf16.mxu0 0
        %1331 = vmatpush1.bf16.msra.mxu0 0
        %1332 = vmatprep.subr.bf16.mxu0 0
        %1333 = vmatpush1.bf16.msra.mxu0 0
        %1334 = vmatprep.subr.bf16.mxu0 0
        %1335 = vmatpush1.bf16.msra.mxu0 0
        %1336 = vmatprep.subr.bf16.mxu0 0
        %1337 = vmatpush1.bf16.msra.mxu0 0
        %1338 = vmatprep.subr.bf16.mxu0 0
        %1339 = vmatpush1.bf16.msra.mxu0 0
        %1340 = vmatprep.subr.bf16.mxu0 0
        %1341 = vmatpush1.bf16.msra.mxu0 0
        %1342 = vmatprep.subr.bf16.mxu0 0
        %1343 = vmatpush1.bf16.msra.mxu0 %v1326
        %1344 = vmatprep.subr.bf16.mxu0 0
        %1345 = vmatpush2.bf16.msra.mxu0 0
        %1346 = vmatprep.subr.bf16.mxu0 0
        %1347 = vmatpush2.bf16.msra.mxu0 0
        %1348 = vmatprep.subr.bf16.mxu0 0
        %1349 = vmatpush2.bf16.msra.mxu0 0
        %1350 = vmatprep.subr.bf16.mxu0 0
        %1351 = vmatpush2.bf16.msra.mxu0 0
        %1352 = vmatprep.subr.bf16.mxu0 0
        %1353 = vmatpush2.bf16.msra.mxu0 0
        %1354 = vmatprep.subr.bf16.mxu0 0
        %1355 = vmatpush2.bf16.msra.mxu0 0
        %1356 = vmatprep.subr.bf16.mxu0 0
        %1357 = vmatpush2.bf16.msra.mxu0 0
        %1358 = vmatprep.subr.bf16.mxu0 0
        %1359 = vmatpush2.bf16.msra.mxu0 0
        %1360 = vmatprep.mubr.bf16.mxu0 0
        %1361 = vmatmul.mubr.bf16.gmra.mxu0 %v1323
        %v1362 = vpop.f32.mrf.mxu0
        %v1363 = vadd.f32 0.0, %v1362
        %v1364 = vpop.f32.mrf.mxu0
        %v1365 = vpop.f32.mrf.mxu0
        %v1366 = vpop.f32.mrf.mxu0
        %1367 = vdwg.mxu0
        %v1368 = vpack.c.bf16 %v1363, %v1315
        %v1370 = vsel %vm911, %v1368, 0
        %v1373 = vsel %vm1051, %v906, 0
        %1375 = vmatprep.subr.bf16.mxu0 0
        %1376 = vmatpush1.bf16.msra.mxu0 0
        %1377 = vmatprep.subr.bf16.mxu0 0
        %1378 = vmatpush1.bf16.msra.mxu0 0
        %1379 = vmatprep.subr.bf16.mxu0 0
        %1380 = vmatpush1.bf16.msra.mxu0 0
        %1381 = vmatprep.subr.bf16.mxu0 0
        %1382 = vmatpush1.bf16.msra.mxu0 0
        %1383 = vmatprep.subr.bf16.mxu0 0
        %1384 = vmatpush1.bf16.msra.mxu0 0
        %1385 = vmatprep.subr.bf16.mxu0 0
        %1386 = vmatpush1.bf16.msra.mxu0 0
        %1387 = vmatprep.subr.bf16.mxu0 0
        %1388 = vmatpush1.bf16.msra.mxu0 0
        %1389 = vmatprep.subr.bf16.mxu0 0
        %1390 = vmatpush1.bf16.msra.mxu0 %v1373
        %1391 = vmatprep.subr.bf16.mxu0 0
        %1392 = vmatpush2.bf16.msra.mxu0 0
        %1393 = vmatprep.subr.bf16.mxu0 0
        %1394 = vmatpush2.bf16.msra.mxu0 0
        %1395 = vmatprep.subr.bf16.mxu0 0
        %1396 = vmatpush2.bf16.msra.mxu0 0
        %1397 = vmatprep.subr.bf16.mxu0 0
        %1398 = vmatpush2.bf16.msra.mxu0 0
        %1399 = vmatprep.subr.bf16.mxu0 0
        %1400 = vmatpush2.bf16.msra.mxu0 0
        %1401 = vmatprep.subr.bf16.mxu0 0
        %1402 = vmatpush2.bf16.msra.mxu0 0
        %1403 = vmatprep.subr.bf16.mxu0 0
        %1404 = vmatpush2.bf16.msra.mxu0 0
        %1405 = vmatprep.subr.bf16.mxu0 0
        %1406 = vmatpush2.bf16.msra.mxu0 0
        %1407 = vmatprep.mubr.bf16.mxu0 0
        %1408 = vmatmul.mubr.bf16.gmra.mxu0 %v1370
        %v1409 = vpop.f32.mrf.mxu0
        %v1410 = vadd.f32 0.0, %v1409
        %v1411 = vpop.f32.mrf.mxu0
        %v1412 = vpop.f32.mrf.mxu0
        %v1413 = vadd.f32 0.0, %v1412
        %v1414 = vpop.f32.mrf.mxu0
        %1415 = vdwg.mxu0
        %v1417 = vsel %vm911, %v1143, 0
        %v1420 = vsel %vm1051, %v905, 0
        %1422 = vmatprep.subr.bf16.mxu0 0
        %1423 = vmatpush1.bf16.msra.mxu0 0
        %1424 = vmatprep.subr.bf16.mxu0 0
        %1425 = vmatpush1.bf16.msra.mxu0 0
        %1426 = vmatprep.subr.bf16.mxu0 0
        %1427 = vmatpush1.bf16.msra.mxu0 0
        %1428 = vmatprep.subr.bf16.mxu0 0
        %1429 = vmatpush1.bf16.msra.mxu0 0
        %1430 = vmatprep.subr.bf16.mxu0 0
        %1431 = vmatpush1.bf16.msra.mxu0 0
        %1432 = vmatprep.subr.bf16.mxu0 0
        %1433 = vmatpush1.bf16.msra.mxu0 0
        %1434 = vmatprep.subr.bf16.mxu0 0
        %1435 = vmatpush1.bf16.msra.mxu0 0
        %1436 = vmatprep.subr.bf16.mxu0 0
        %1437 = vmatpush1.bf16.msra.mxu0 %v1420
        %1438 = vmatprep.subr.bf16.mxu0 0
        %1439 = vmatpush2.bf16.msra.mxu0 0
        %1440 = vmatprep.subr.bf16.mxu0 0
        %1441 = vmatpush2.bf16.msra.mxu0 0
        %1442 = vmatprep.subr.bf16.mxu0 0
        %1443 = vmatpush2.bf16.msra.mxu0 0
        %1444 = vmatprep.subr.bf16.mxu0 0
        %1445 = vmatpush2.bf16.msra.mxu0 0
        %1446 = vmatprep.subr.bf16.mxu0 0
        %1447 = vmatpush2.bf16.msra.mxu0 0
        %1448 = vmatprep.subr.bf16.mxu0 0
        %1449 = vmatpush2.bf16.msra.mxu0 0
        %1450 = vmatprep.subr.bf16.mxu0 0
        %1451 = vmatpush2.bf16.msra.mxu0 0
        %1452 = vmatprep.subr.bf16.mxu0 0
        %1453 = vmatpush2.bf16.msra.mxu0 0
        %1454 = vmatprep.mubr.bf16.mxu0 0
        %1455 = vmatmul.mubr.bf16.gmra.mxu0 %v1417
        %v1456 = vpop.f32.mrf.mxu0
        %v1457 = vadd.f32 %v1410, %v1456
        %v1458 = vpop.f32.mrf.mxu0
        %v1459 = vpop.f32.mrf.mxu0
        %v1460 = vadd.f32 %v1413, %v1459
        %v1461 = vpop.f32.mrf.mxu0
        %1462 = vdwg.mxu0
        %1463 = vrot.lane.b32.xlu0 %v901, 112
        %v1464 = vpop.permute.xlu0 %1463
        %1465 = vrot.lane.b32.xlu0 %v901, 80
        %v1466 = vpop.permute.xlu0 %1465
        %v1468 = vsel %vm911, %v1464, 0
        %v1471 = vsel %vm911, %v1466, 0
        %1473 = vmatprep.subr.bf16.mxu0 0
        %1474 = vmatpush1.bf16.xpose.msra.mxu0 0
        %1475 = vmatprep.subr.bf16.mxu0 0
        %1476 = vmatpush1.bf16.xpose.msra.mxu0 0
        %1477 = vmatprep.subr.bf16.mxu0 0
        %1478 = vmatpush1.bf16.xpose.msra.mxu0 0
        %1479 = vmatprep.subr.bf16.mxu0 0
        %1480 = vmatpush1.bf16.xpose.msra.mxu0 0
        %1481 = vmatprep.subr.bf16.mxu0 0
        %1482 = vmatpush1.bf16.xpose.msra.mxu0 0
        %1483 = vmatprep.subr.bf16.mxu0 0
        %1484 = vmatpush1.bf16.xpose.msra.mxu0 0
        %1485 = vmatprep.subr.bf16.mxu0 0
        %1486 = vmatpush1.bf16.xpose.msra.mxu0 0
        %1487 = vmatprep.subr.bf16.mxu0 0
        %1488 = vmatpush1.bf16.xpose.msra.mxu0 %v1471
        %1489 = vmatprep.subr.bf16.mxu0 0
        %1490 = vmatpush2.bf16.xpose.msra.mxu0 0
        %1491 = vmatprep.subr.bf16.mxu0 0
        %1492 = vmatpush2.bf16.xpose.msra.mxu0 0
        %1493 = vmatprep.subr.bf16.mxu0 0
        %1494 = vmatpush2.bf16.xpose.msra.mxu0 0
        %1495 = vmatprep.subr.bf16.mxu0 0
        %1496 = vmatpush2.bf16.xpose.msra.mxu0 0
        %1497 = vmatprep.subr.bf16.mxu0 0
        %1498 = vmatpush2.bf16.xpose.msra.mxu0 0
        %1499 = vmatprep.subr.bf16.mxu0 0
        %1500 = vmatpush2.bf16.xpose.msra.mxu0 0
        %1501 = vmatprep.subr.bf16.mxu0 0
        %1502 = vmatpush2.bf16.xpose.msra.mxu0 0
        %1503 = vmatprep.subr.bf16.mxu0 0
        %1504 = vmatpush2.bf16.xpose.msra.mxu0 0
        %1505 = vmatprep.mubr.bf16.mxu0 0
        %1506 = vmatmul.mubr.bf16.gmra.mxu0 %v1468
        %v1507 = vpop.f32.mrf.mxu0
        %v1508 = vadd.f32 0.0, %v1507
        %v1509 = vpop.f32.mrf.mxu0
        %v1510 = vpop.f32.mrf.mxu0
        %v1511 = vpop.f32.mrf.mxu0
        %1512 = vdwg.mxu0
        %1513 = vrot.lane.b32.xlu0 %v902, 112
        %v1514 = vpop.permute.xlu0 %1513
        %1515 = vrot.lane.b32.xlu0 %v902, 80
        %v1516 = vpop.permute.xlu0 %1515
        %v1518 = vsel %vm911, %v1514, 0
        %v1521 = vsel %vm911, %v1516, 0
        %1523 = vmatprep.subr.bf16.mxu0 0
        %1524 = vmatpush1.bf16.xpose.msra.mxu0 0
        %1525 = vmatprep.subr.bf16.mxu0 0
        %1526 = vmatpush1.bf16.xpose.msra.mxu0 0
        %1527 = vmatprep.subr.bf16.mxu0 0
        %1528 = vmatpush1.bf16.xpose.msra.mxu0 0
        %1529 = vmatprep.subr.bf16.mxu0 0
        %1530 = vmatpush1.bf16.xpose.msra.mxu0 0
        %1531 = vmatprep.subr.bf16.mxu0 0
        %1532 = vmatpush1.bf16.xpose.msra.mxu0 0
        %1533 = vmatprep.subr.bf16.mxu0 0
        %1534 = vmatpush1.bf16.xpose.msra.mxu0 0
        %1535 = vmatprep.subr.bf16.mxu0 0
        %1536 = vmatpush1.bf16.xpose.msra.mxu0 0
        %1537 = vmatprep.subr.bf16.mxu0 0
        %1538 = vmatpush1.bf16.xpose.msra.mxu0 %v1521
        %1539 = vmatprep.subr.bf16.mxu0 0
        %1540 = vmatpush2.bf16.xpose.msra.mxu0 0
        %1541 = vmatprep.subr.bf16.mxu0 0
        %1542 = vmatpush2.bf16.xpose.msra.mxu0 0
        %1543 = vmatprep.subr.bf16.mxu0 0
        %1544 = vmatpush2.bf16.xpose.msra.mxu0 0
        %1545 = vmatprep.subr.bf16.mxu0 0
        %1546 = vmatpush2.bf16.xpose.msra.mxu0 0
        %1547 = vmatprep.subr.bf16.mxu0 0
        %1548 = vmatpush2.bf16.xpose.msra.mxu0 0
        %1549 = vmatprep.subr.bf16.mxu0 0
        %1550 = vmatpush2.bf16.xpose.msra.mxu0 0
        %1551 = vmatprep.subr.bf16.mxu0 0
        %1552 = vmatpush2.bf16.xpose.msra.mxu0 0
        %1553 = vmatprep.subr.bf16.mxu0 0
        %1554 = vmatpush2.bf16.xpose.msra.mxu0 0
        %1555 = vmatprep.mubr.bf16.mxu0 0
        %1556 = vmatmul.mubr.bf16.gmra.mxu0 %v1518
        %v1557 = vpop.f32.mrf.mxu0
        %v1558 = vadd.f32 0.0, %v1557
        %v1559 = vpop.f32.mrf.mxu0
        %v1560 = vpop.f32.mrf.mxu0
        %v1561 = vpop.f32.mrf.mxu0
        %1562 = vdwg.mxu0
        %v1563 = vmul.f32 %v1508, 0.35355338
        %v1564 = vmul.f32 %v1558, 0.35355338
        %v1565 = vadd.f32 %v1563, %v1013
        %v1566 = vadd.f32 %v1564, %v1017
        %v1567 = vsel %vm911, %v1565, -inf
        %1568 = vmax.xlane.f32.xlu0 %v1567
        %v1569 = vpop.xlane.xlu0 %1568
        %v1570 = vsel %vm911, %v1566, -inf
        %1571 = vmax.xlane.f32.xlu0 %v1570
        %v1572 = vpop.xlane.xlu0 %1571
        %v1573 = vsub.f32 %v1565, %v1569
        %v1574 = vsub.f32 %v1566, %v1572
        %v1575 = vmul.f32 %v1573, 1.442695
        %v1576 = vpow.pop %v1575
        %v1577 = vmul.f32 %v1574, 1.442695
        %v1578 = vpow.pop %v1577
        %v1579 = vsel %vm911, %v1576, 0.0
        %1580 = vadd.xlane.f32.xlu0 %v1579
        %v1581 = vpop.xlane.xlu0 %1580
        %v1582 = vsel %vm911, %v1578, 0.0
        %1583 = vadd.xlane.f32.xlu0 %v1582
        %v1584 = vpop.xlane.xlu0 %1583
        %v1585 = vrcp.pop %v1581
        %v1586 = vrcp.pop %v1584
        %v1587 = vmul.f32 %v1576, %v1585
        %v1588 = vmul.f32 %v1578, %v1586
        %v1589 = vpack.c.bf16 %v1587, %v1587
        %v1590 = vpack.c.bf16 %v1588, %v1588
        %1591 = vrot.lane.b32.xlu0 %v901, 48
        %v1592 = vpop.permute.xlu0 %1591
        %v1594 = vsel %vm911, %v1589, 0
        %v1597 = vsel %vm1051, %v1592, 0
        %1599 = vmatprep.subr.bf16.mxu0 0
        %1600 = vmatpush1.bf16.msra.mxu0 0
        %1601 = vmatprep.subr.bf16.mxu0 0
        %1602 = vmatpush1.bf16.msra.mxu0 0
        %1603 = vmatprep.subr.bf16.mxu0 0
        %1604 = vmatpush1.bf16.msra.mxu0 0
        %1605 = vmatprep.subr.bf16.mxu0 0
        %1606 = vmatpush1.bf16.msra.mxu0 0
        %1607 = vmatprep.subr.bf16.mxu0 0
        %1608 = vmatpush1.bf16.msra.mxu0 0
        %1609 = vmatprep.subr.bf16.mxu0 0
        %1610 = vmatpush1.bf16.msra.mxu0 0
        %1611 = vmatprep.subr.bf16.mxu0 0
        %1612 = vmatpush1.bf16.msra.mxu0 0
        %1613 = vmatprep.subr.bf16.mxu0 0
        %1614 = vmatpush1.bf16.msra.mxu0 %v1597
        %1615 = vmatprep.subr.bf16.mxu0 0
        %1616 = vmatpush2.bf16.msra.mxu0 0
        %1617 = vmatprep.subr.bf16.mxu0 0
        %1618 = vmatpush2.bf16.msra.mxu0 0
        %1619 = vmatprep.subr.bf16.mxu0 0
        %1620 = vmatpush2.bf16.msra.mxu0 0
        %1621 = vmatprep.subr.bf16.mxu0 0
        %1622 = vmatpush2.bf16.msra.mxu0 0
        %1623 = vmatprep.subr.bf16.mxu0 0
        %1624 = vmatpush2.bf16.msra.mxu0 0
        %1625 = vmatprep.subr.bf16.mxu0 0
        %1626 = vmatpush2.bf16.msra.mxu0 0
        %1627 = vmatprep.subr.bf16.mxu0 0
        %1628 = vmatpush2.bf16.msra.mxu0 0
        %1629 = vmatprep.subr.bf16.mxu0 0
        %1630 = vmatpush2.bf16.msra.mxu0 0
        %1631 = vmatprep.mubr.bf16.mxu0 0
        %1632 = vmatmul.mubr.bf16.gmra.mxu0 %v1594
        %v1633 = vpop.f32.mrf.mxu0
        %v1634 = vadd.f32 0.0, %v1633
        %v1635 = vpop.f32.mrf.mxu0
        %v1636 = vpop.f32.mrf.mxu0
        %v1637 = vpop.f32.mrf.mxu0
        %1638 = vdwg.mxu0
        %1639 = vrot.lane.b32.xlu0 %v902, 48
        %v1640 = vpop.permute.xlu0 %1639
        %v1642 = vsel %vm911, %v1590, 0
        %v1645 = vsel %vm1051, %v1640, 0
        %1647 = vmatprep.subr.bf16.mxu0 0
        %1648 = vmatpush1.bf16.msra.mxu0 0
        %1649 = vmatprep.subr.bf16.mxu0 0
        %1650 = vmatpush1.bf16.msra.mxu0 0
        %1651 = vmatprep.subr.bf16.mxu0 0
        %1652 = vmatpush1.bf16.msra.mxu0 0
        %1653 = vmatprep.subr.bf16.mxu0 0
        %1654 = vmatpush1.bf16.msra.mxu0 0
        %1655 = vmatprep.subr.bf16.mxu0 0
        %1656 = vmatpush1.bf16.msra.mxu0 0
        %1657 = vmatprep.subr.bf16.mxu0 0
        %1658 = vmatpush1.bf16.msra.mxu0 0
        %1659 = vmatprep.subr.bf16.mxu0 0
        %1660 = vmatpush1.bf16.msra.mxu0 0
        %1661 = vmatprep.subr.bf16.mxu0 0
        %1662 = vmatpush1.bf16.msra.mxu0 %v1645
        %1663 = vmatprep.subr.bf16.mxu0 0
        %1664 = vmatpush2.bf16.msra.mxu0 0
        %1665 = vmatprep.subr.bf16.mxu0 0
        %1666 = vmatpush2.bf16.msra.mxu0 0
        %1667 = vmatprep.subr.bf16.mxu0 0
        %1668 = vmatpush2.bf16.msra.mxu0 0
        %1669 = vmatprep.subr.bf16.mxu0 0
        %1670 = vmatpush2.bf16.msra.mxu0 0
        %1671 = vmatprep.subr.bf16.mxu0 0
        %1672 = vmatpush2.bf16.msra.mxu0 0
        %1673 = vmatprep.subr.bf16.mxu0 0
        %1674 = vmatpush2.bf16.msra.mxu0 0
        %1675 = vmatprep.subr.bf16.mxu0 0
        %1676 = vmatpush2.bf16.msra.mxu0 0
        %1677 = vmatprep.subr.bf16.mxu0 0
        %1678 = vmatpush2.bf16.msra.mxu0 0
        %1679 = vmatprep.mubr.bf16.mxu0 0
        %1680 = vmatmul.mubr.bf16.gmra.mxu0 %v1642
        %v1681 = vpop.f32.mrf.mxu0
        %v1682 = vadd.f32 0.0, %v1681
        %v1683 = vpop.f32.mrf.mxu0
        %v1684 = vpop.f32.mrf.mxu0
        %v1685 = vpop.f32.mrf.mxu0
        %1686 = vdwg.mxu0
        %v1687 = vpack.c.bf16 %v1682, %v1634
        %v1689 = vsel %vm911, %v1687, 0
        %v1692 = vsel %vm1051, %v907, 0
        %1694 = vmatprep.subr.bf16.mxu0 0
        %1695 = vmatpush1.bf16.msra.mxu0 0
        %1696 = vmatprep.subr.bf16.mxu0 0
        %1697 = vmatpush1.bf16.msra.mxu0 0
        %1698 = vmatprep.subr.bf16.mxu0 0
        %1699 = vmatpush1.bf16.msra.mxu0 0
        %1700 = vmatprep.subr.bf16.mxu0 0
        %1701 = vmatpush1.bf16.msra.mxu0 0
        %1702 = vmatprep.subr.bf16.mxu0 0
        %1703 = vmatpush1.bf16.msra.mxu0 0
        %1704 = vmatprep.subr.bf16.mxu0 0
        %1705 = vmatpush1.bf16.msra.mxu0 0
        %1706 = vmatprep.subr.bf16.mxu0 0
        %1707 = vmatpush1.bf16.msra.mxu0 0
        %1708 = vmatprep.subr.bf16.mxu0 0
        %1709 = vmatpush1.bf16.msra.mxu0 %v1692
        %1710 = vmatprep.subr.bf16.mxu0 0
        %1711 = vmatpush2.bf16.msra.mxu0 0
        %1712 = vmatprep.subr.bf16.mxu0 0
        %1713 = vmatpush2.bf16.msra.mxu0 0
        %1714 = vmatprep.subr.bf16.mxu0 0
        %1715 = vmatpush2.bf16.msra.mxu0 0
        %1716 = vmatprep.subr.bf16.mxu0 0
        %1717 = vmatpush2.bf16.msra.mxu0 0
        %1718 = vmatprep.subr.bf16.mxu0 0
        %1719 = vmatpush2.bf16.msra.mxu0 0
        %1720 = vmatprep.subr.bf16.mxu0 0
        %1721 = vmatpush2.bf16.msra.mxu0 0
        %1722 = vmatprep.subr.bf16.mxu0 0
        %1723 = vmatpush2.bf16.msra.mxu0 0
        %1724 = vmatprep.subr.bf16.mxu0 0
        %1725 = vmatpush2.bf16.msra.mxu0 0
        %1726 = vmatprep.mubr.bf16.mxu0 0
        %1727 = vmatmul.mubr.bf16.gmra.mxu0 %v1689
        %v1728 = vpop.f32.mrf.mxu0
        %v1729 = vadd.f32 0.0, %v1728
        %v1730 = vpop.f32.mrf.mxu0
        %v1731 = vpop.f32.mrf.mxu0
        %v1732 = vadd.f32 0.0, %v1731
        %v1733 = vpop.f32.mrf.mxu0
        %1734 = vdwg.mxu0
        %v1735 = vadd.f32 %v1457, %v1729
        %v1736 = vadd.f32 %v1460, %v1732
        %1737 = vrot.lane.b32.xlu0 %v901, 104
        %v1738 = vpop.permute.xlu0 %1737
        %1739 = vrot.lane.b32.xlu0 %v901, 72
        %v1740 = vpop.permute.xlu0 %1739
        %v1742 = vsel %vm911, %v1738, 0
        %v1745 = vsel %vm911, %v1740, 0
        %1747 = vmatprep.subr.bf16.mxu0 0
        %1748 = vmatpush1.bf16.xpose.msra.mxu0 0
        %1749 = vmatprep.subr.bf16.mxu0 0
        %1750 = vmatpush1.bf16.xpose.msra.mxu0 0
        %1751 = vmatprep.subr.bf16.mxu0 0
        %1752 = vmatpush1.bf16.xpose.msra.mxu0 0
        %1753 = vmatprep.subr.bf16.mxu0 0
        %1754 = vmatpush1.bf16.xpose.msra.mxu0 0
        %1755 = vmatprep.subr.bf16.mxu0 0
        %1756 = vmatpush1.bf16.xpose.msra.mxu0 0
        %1757 = vmatprep.subr.bf16.mxu0 0
        %1758 = vmatpush1.bf16.xpose.msra.mxu0 0
        %1759 = vmatprep.subr.bf16.mxu0 0
        %1760 = vmatpush1.bf16.xpose.msra.mxu0 0
        %1761 = vmatprep.subr.bf16.mxu0 0
        %1762 = vmatpush1.bf16.xpose.msra.mxu0 %v1745
        %1763 = vmatprep.subr.bf16.mxu0 0
        %1764 = vmatpush2.bf16.xpose.msra.mxu0 0
        %1765 = vmatprep.subr.bf16.mxu0 0
        %1766 = vmatpush2.bf16.xpose.msra.mxu0 0
        %1767 = vmatprep.subr.bf16.mxu0 0
        %1768 = vmatpush2.bf16.xpose.msra.mxu0 0
        %1769 = vmatprep.subr.bf16.mxu0 0
        %1770 = vmatpush2.bf16.xpose.msra.mxu0 0
        %1771 = vmatprep.subr.bf16.mxu0 0
        %1772 = vmatpush2.bf16.xpose.msra.mxu0 0
        %1773 = vmatprep.subr.bf16.mxu0 0
        %1774 = vmatpush2.bf16.xpose.msra.mxu0 0
        %1775 = vmatprep.subr.bf16.mxu0 0
        %1776 = vmatpush2.bf16.xpose.msra.mxu0 0
        %1777 = vmatprep.subr.bf16.mxu0 0
        %1778 = vmatpush2.bf16.xpose.msra.mxu0 0
        %1779 = vmatprep.mubr.bf16.mxu0 0
        %1780 = vmatmul.mubr.bf16.gmra.mxu0 %v1742
        %v1781 = vpop.f32.mrf.mxu0
        %v1782 = vadd.f32 0.0, %v1781
        %v1783 = vpop.f32.mrf.mxu0
        %v1784 = vpop.f32.mrf.mxu0
        %v1785 = vpop.f32.mrf.mxu0
        %1786 = vdwg.mxu0
        %1787 = vrot.lane.b32.xlu0 %v902, 104
        %v1788 = vpop.permute.xlu0 %1787
        %1789 = vrot.lane.b32.xlu0 %v902, 72
        %v1790 = vpop.permute.xlu0 %1789
        %v1792 = vsel %vm911, %v1788, 0
        %v1795 = vsel %vm911, %v1790, 0
        %1797 = vmatprep.subr.bf16.mxu0 0
        %1798 = vmatpush1.bf16.xpose.msra.mxu0 0
        %1799 = vmatprep.subr.bf16.mxu0 0
        %1800 = vmatpush1.bf16.xpose.msra.mxu0 0
        %1801 = vmatprep.subr.bf16.mxu0 0
        %1802 = vmatpush1.bf16.xpose.msra.mxu0 0
        %1803 = vmatprep.subr.bf16.mxu0 0
        %1804 = vmatpush1.bf16.xpose.msra.mxu0 0
        %1805 = vmatprep.subr.bf16.mxu0 0
        %1806 = vmatpush1.bf16.xpose.msra.mxu0 0
        %1807 = vmatprep.subr.bf16.mxu0 0
        %1808 = vmatpush1.bf16.xpose.msra.mxu0 0
        %1809 = vmatprep.subr.bf16.mxu0 0
        %1810 = vmatpush1.bf16.xpose.msra.mxu0 0
        %1811 = vmatprep.subr.bf16.mxu0 0
        %1812 = vmatpush1.bf16.xpose.msra.mxu0 %v1795
        %1813 = vmatprep.subr.bf16.mxu0 0
        %1814 = vmatpush2.bf16.xpose.msra.mxu0 0
        %1815 = vmatprep.subr.bf16.mxu0 0
        %1816 = vmatpush2.bf16.xpose.msra.mxu0 0
        %1817 = vmatprep.subr.bf16.mxu0 0
        %1818 = vmatpush2.bf16.xpose.msra.mxu0 0
        %1819 = vmatprep.subr.bf16.mxu0 0
        %1820 = vmatpush2.bf16.xpose.msra.mxu0 0
        %1821 = vmatprep.subr.bf16.mxu0 0
        %1822 = vmatpush2.bf16.xpose.msra.mxu0 0
        %1823 = vmatprep.subr.bf16.mxu0 0
        %1824 = vmatpush2.bf16.xpose.msra.mxu0 0
        %1825 = vmatprep.subr.bf16.mxu0 0
        %1826 = vmatpush2.bf16.xpose.msra.mxu0 0
        %1827 = vmatprep.subr.bf16.mxu0 0
        %1828 = vmatpush2.bf16.xpose.msra.mxu0 0
        %1829 = vmatprep.mubr.bf16.mxu0 0
        %1830 = vmatmul.mubr.bf16.gmra.mxu0 %v1792
        %v1831 = vpop.f32.mrf.mxu0
        %v1832 = vadd.f32 0.0, %v1831
        %v1833 = vpop.f32.mrf.mxu0
        %v1834 = vpop.f32.mrf.mxu0
        %v1835 = vpop.f32.mrf.mxu0
        %1836 = vdwg.mxu0
        %v1837 = vmul.f32 %v1782, 0.35355338
        %v1838 = vmul.f32 %v1832, 0.35355338
        %v1839 = vadd.f32 %v1837, %v1013
        %v1840 = vadd.f32 %v1838, %v1017
        %v1841 = vsel %vm911, %v1839, -inf
        %1842 = vmax.xlane.f32.xlu0 %v1841
        %v1843 = vpop.xlane.xlu0 %1842
        %v1844 = vsel %vm911, %v1840, -inf
        %1845 = vmax.xlane.f32.xlu0 %v1844
        %v1846 = vpop.xlane.xlu0 %1845
        %v1847 = vsub.f32 %v1839, %v1843
        %v1848 = vsub.f32 %v1840, %v1846
        %v1849 = vmul.f32 %v1847, 1.442695
        %v1850 = vpow.pop %v1849
        %v1851 = vmul.f32 %v1848, 1.442695
        %v1852 = vpow.pop %v1851
        %v1853 = vsel %vm911, %v1850, 0.0
        %1854 = vadd.xlane.f32.xlu0 %v1853
        %v1855 = vpop.xlane.xlu0 %1854
        %v1856 = vsel %vm911, %v1852, 0.0
        %1857 = vadd.xlane.f32.xlu0 %v1856
        %v1858 = vpop.xlane.xlu0 %1857
        %v1859 = vrcp.pop %v1855
        %v1860 = vrcp.pop %v1858
        %v1861 = vmul.f32 %v1850, %v1859
        %v1862 = vmul.f32 %v1852, %v1860
        %v1863 = vpack.c.bf16 %v1861, %v1861
        %v1864 = vpack.c.bf16 %v1862, %v1862
        %1865 = vrot.lane.b32.xlu0 %v901, 40
        %v1866 = vpop.permute.xlu0 %1865
        %v1868 = vsel %vm911, %v1863, 0
        %v1871 = vsel %vm1051, %v1866, 0
        %1873 = vmatprep.subr.bf16.mxu0 0
        %1874 = vmatpush1.bf16.msra.mxu0 0
        %1875 = vmatprep.subr.bf16.mxu0 0
        %1876 = vmatpush1.bf16.msra.mxu0 0
        %1877 = vmatprep.subr.bf16.mxu0 0
        %1878 = vmatpush1.bf16.msra.mxu0 0
        %1879 = vmatprep.subr.bf16.mxu0 0
        %1880 = vmatpush1.bf16.msra.mxu0 0
        %1881 = vmatprep.subr.bf16.mxu0 0
        %1882 = vmatpush1.bf16.msra.mxu0 0
        %1883 = vmatprep.subr.bf16.mxu0 0
        %1884 = vmatpush1.bf16.msra.mxu0 0
        %1885 = vmatprep.subr.bf16.mxu0 0
        %1886 = vmatpush1.bf16.msra.mxu0 0
        %1887 = vmatprep.subr.bf16.mxu0 0
        %1888 = vmatpush1.bf16.msra.mxu0 %v1871
        %1889 = vmatprep.subr.bf16.mxu0 0
        %1890 = vmatpush2.bf16.msra.mxu0 0
        %1891 = vmatprep.subr.bf16.mxu0 0
        %1892 = vmatpush2.bf16.msra.mxu0 0
        %1893 = vmatprep.subr.bf16.mxu0 0
        %1894 = vmatpush2.bf16.msra.mxu0 0
        %1895 = vmatprep.subr.bf16.mxu0 0
        %1896 = vmatpush2.bf16.msra.mxu0 0
        %1897 = vmatprep.subr.bf16.mxu0 0
        %1898 = vmatpush2.bf16.msra.mxu0 0
        %1899 = vmatprep.subr.bf16.mxu0 0
        %1900 = vmatpush2.bf16.msra.mxu0 0
        %1901 = vmatprep.subr.bf16.mxu0 0
        %1902 = vmatpush2.bf16.msra.mxu0 0
        %1903 = vmatprep.subr.bf16.mxu0 0
        %1904 = vmatpush2.bf16.msra.mxu0 0
        %1905 = vmatprep.mubr.bf16.mxu0 0
        %1906 = vmatmul.mubr.bf16.gmra.mxu0 %v1868
        %v1907 = vpop.f32.mrf.mxu0
        %v1908 = vadd.f32 0.0, %v1907
        %v1909 = vpop.f32.mrf.mxu0
        %v1910 = vpop.f32.mrf.mxu0
        %v1911 = vpop.f32.mrf.mxu0
        %1912 = vdwg.mxu0
        %1913 = vrot.lane.b32.xlu0 %v902, 40
        %v1914 = vpop.permute.xlu0 %1913
        %v1916 = vsel %vm911, %v1864, 0
        %v1919 = vsel %vm1051, %v1914, 0
        %1921 = vmatprep.subr.bf16.mxu0 0
        %1922 = vmatpush1.bf16.msra.mxu0 0
        %1923 = vmatprep.subr.bf16.mxu0 0
        %1924 = vmatpush1.bf16.msra.mxu0 0
        %1925 = vmatprep.subr.bf16.mxu0 0
        %1926 = vmatpush1.bf16.msra.mxu0 0
        %1927 = vmatprep.subr.bf16.mxu0 0
        %1928 = vmatpush1.bf16.msra.mxu0 0
        %1929 = vmatprep.subr.bf16.mxu0 0
        %1930 = vmatpush1.bf16.msra.mxu0 0
        %1931 = vmatprep.subr.bf16.mxu0 0
        %1932 = vmatpush1.bf16.msra.mxu0 0
        %1933 = vmatprep.subr.bf16.mxu0 0
        %1934 = vmatpush1.bf16.msra.mxu0 0
        %1935 = vmatprep.subr.bf16.mxu0 0
        %1936 = vmatpush1.bf16.msra.mxu0 %v1919
        %1937 = vmatprep.subr.bf16.mxu0 0
        %1938 = vmatpush2.bf16.msra.mxu0 0
        %1939 = vmatprep.subr.bf16.mxu0 0
        %1940 = vmatpush2.bf16.msra.mxu0 0
        %1941 = vmatprep.subr.bf16.mxu0 0
        %1942 = vmatpush2.bf16.msra.mxu0 0
        %1943 = vmatprep.subr.bf16.mxu0 0
        %1944 = vmatpush2.bf16.msra.mxu0 0
        %1945 = vmatprep.subr.bf16.mxu0 0
        %1946 = vmatpush2.bf16.msra.mxu0 0
        %1947 = vmatprep.subr.bf16.mxu0 0
        %1948 = vmatpush2.bf16.msra.mxu0 0
        %1949 = vmatprep.subr.bf16.mxu0 0
        %1950 = vmatpush2.bf16.msra.mxu0 0
        %1951 = vmatprep.subr.bf16.mxu0 0
        %1952 = vmatpush2.bf16.msra.mxu0 0
        %1953 = vmatprep.mubr.bf16.mxu0 0
        %1954 = vmatmul.mubr.bf16.gmra.mxu0 %v1916
        %v1955 = vpop.f32.mrf.mxu0
        %v1956 = vadd.f32 0.0, %v1955
        %v1957 = vpop.f32.mrf.mxu0
        %v1958 = vpop.f32.mrf.mxu0
        %v1959 = vpop.f32.mrf.mxu0
        %1960 = vdwg.mxu0
        %v1961 = vpack.c.bf16 %v1956, %v1908
        %v1963 = vsel %vm911, %v1961, 0
        %v1966 = vsel %vm1051, %v908, 0
        %1968 = vmatprep.subr.bf16.mxu0 0
        %1969 = vmatpush1.bf16.msra.mxu0 0
        %1970 = vmatprep.subr.bf16.mxu0 0
        %1971 = vmatpush1.bf16.msra.mxu0 0
        %1972 = vmatprep.subr.bf16.mxu0 0
        %1973 = vmatpush1.bf16.msra.mxu0 0
        %1974 = vmatprep.subr.bf16.mxu0 0
        %1975 = vmatpush1.bf16.msra.mxu0 0
        %1976 = vmatprep.subr.bf16.mxu0 0
        %1977 = vmatpush1.bf16.msra.mxu0 0
        %1978 = vmatprep.subr.bf16.mxu0 0
        %1979 = vmatpush1.bf16.msra.mxu0 0
        %1980 = vmatprep.subr.bf16.mxu0 0
        %1981 = vmatpush1.bf16.msra.mxu0 0
        %1982 = vmatprep.subr.bf16.mxu0 0
        %1983 = vmatpush1.bf16.msra.mxu0 %v1966
        %1984 = vmatprep.subr.bf16.mxu0 0
        %1985 = vmatpush2.bf16.msra.mxu0 0
        %1986 = vmatprep.subr.bf16.mxu0 0
        %1987 = vmatpush2.bf16.msra.mxu0 0
        %1988 = vmatprep.subr.bf16.mxu0 0
        %1989 = vmatpush2.bf16.msra.mxu0 0
        %1990 = vmatprep.subr.bf16.mxu0 0
        %1991 = vmatpush2.bf16.msra.mxu0 0
        %1992 = vmatprep.subr.bf16.mxu0 0
        %1993 = vmatpush2.bf16.msra.mxu0 0
        %1994 = vmatprep.subr.bf16.mxu0 0
        %1995 = vmatpush2.bf16.msra.mxu0 0
        %1996 = vmatprep.subr.bf16.mxu0 0
        %1997 = vmatpush2.bf16.msra.mxu0 0
        %1998 = vmatprep.subr.bf16.mxu0 0
        %1999 = vmatpush2.bf16.msra.mxu0 0
        %2000 = vmatprep.mubr.bf16.mxu0 0
        %2001 = vmatmul.mubr.bf16.gmra.mxu0 %v1963
        %v2002 = vpop.f32.mrf.mxu0
        %v2003 = vadd.f32 0.0, %v2002
        %v2004 = vpop.f32.mrf.mxu0
        %v2005 = vpop.f32.mrf.mxu0
        %v2006 = vadd.f32 0.0, %v2005
        %v2007 = vpop.f32.mrf.mxu0
        %2008 = vdwg.mxu0
        %v2009 = vadd.f32 %v1735, %v2003
        %v2010 = vadd.f32 %v1736, %v2006
        %v2011 = vld [vmem:[%s741] sm:$0x1]
        %v2013 = vlaneseq
        %v2014 = vshrl.u32 %v2013, 7
        %v2015 = vsub.s32 0, %v2014
        %v2016 = vrot.slane %v2011, %v2015
        %v2018 = vadd.f32 %v2009, %v2016
        %v2019 = vadd.f32 %v2010, %v2016
        %v2020 = vadd.f32 %v2018, %v826
        %v2021 = vadd.f32 %v2019, %v827
        %v2022 = vld [vmem:[%s744] sm:$0x1]
        %v2023 = vld [vmem:[%s747] sm:$0x1]
        %v2024 = vsel %vm852, %v2020, 0.0
        %2025 = vadd.xlane.f32.xlu0 %v2024
        %v2026 = vpop.xlane.xlu0 %2025
        %v2027 = vsel %vm852, %v2021, 0.0
        %2028 = vadd.xlane.f32.xlu0 %v2027
        %v2029 = vpop.xlane.xlu0 %2028
        %v2030 = vrcp.pop 32.0
        %v2031 = vmul.f32 %v2026, %v2030
        %v2032 = vmul.f32 %v2029, %v2030
        %v2033 = vsub.f32 %v2020, %v2031
        %v2034 = vsub.f32 %v2021, %v2032
        %v2035 = vmul.f32 %v2033, %v2033
        %v2036 = vmul.f32 %v2034, %v2034
        %v2037 = vsel %vm852, %v2035, 0.0
        %2038 = vadd.xlane.f32.xlu0 %v2037
        %v2039 = vpop.xlane.xlu0 %2038
        %v2040 = vsel %vm852, %v2036, 0.0
        %2041 = vadd.xlane.f32.xlu0 %v2040
        %v2042 = vpop.xlane.xlu0 %2041
        %v2043 = vmul.f32 %v2039, %v2030
        %v2044 = vmul.f32 %v2042, %v2030
        %v2045 = vadd.f32 %v2043, 1e-12
        %v2046 = vadd.f32 %v2044, 1e-12
        %v2047 = vrsqrt.pop %v2045
        %v2048 = vrsqrt.pop %v2046
        %v2049 = vmul.f32 %v2033, %v2047
        %v2050 = vmul.f32 %v2034, %v2048
        %v2052 = vlaneseq
        %v2053 = vshrl.u32 %v2052, 7
        %v2054 = vsub.s32 0, %v2053
        %v2055 = vrot.slane %v2022, %v2054
        %v2057 = vmul.f32 %v2049, %v2055
        %v2058 = vmul.f32 %v2050, %v2055
        %v2060 = vlaneseq
        %v2061 = vshrl.u32 %v2060, 7
        %v2062 = vsub.s32 0, %v2061
        %v2063 = vrot.slane %v2023, %v2062
        %v2065 = vadd.f32 %v2057, %v2063
        %v2066 = vadd.f32 %v2058, %v2063
        %v2067 = vpack.c.bf16 %v2066, %v2065
        %v2068 = vld [vmem:[%s752] sm:$0xf]
        %v2069 = vld [vmem:[%s752 + $0x4] sm:$0xf]
        %v2070 = vld [vmem:[%s752 + $0x8] sm:$0xf]
        %v2071 = vld [vmem:[%s752 + $0xc] sm:$0xf]
        %v2072 = vld [vmem:[%s755] sm:$0x1]
        %v2074 = vlaneseq
        %v2075 = vshrl.u32 %v2074, 7
        %v2076 = vsub.s32 0, %v2075
        %v2077 = vrot.slane %v2072, %v2076
        %v2083 = vunpack.c.l.b16 %v2068
        %v2084 = vunpack.c.l.b16 %v2069
        %v2085 = vunpack.c.l.b16 %v2070
        %v2086 = vunpack.c.l.b16 %v2071
        %v2087 = vpack.c.b16 %v2084, %v2083
        %v2088 = vpack.c.b16 %v2086, %v2085
        %v2092 = vsel %vm852, %v2067, 0
        %2094 = vmatprep.subr.bf16.mxu0 0
        %2095 = vmatpush1.bf16.msra.mxu0 0
        %2096 = vmatprep.subr.bf16.mxu0 0
        %2097 = vmatpush1.bf16.msra.mxu0 0
        %2098 = vmatprep.subr.bf16.mxu0 0
        %2099 = vmatpush1.bf16.msra.mxu0 0
        %2100 = vmatprep.subr.bf16.mxu0 0
        %2101 = vmatpush1.bf16.msra.mxu0 0
        %2102 = vmatprep.subr.bf16.mxu0 0
        %2103 = vmatpush1.bf16.msra.mxu0 0
        %2104 = vmatprep.subr.bf16.mxu0 0
        %2105 = vmatpush1.bf16.msra.mxu0 0
        %2106 = vmatprep.subr.bf16.mxu0 0
        %2107 = vmatpush1.bf16.msra.mxu0 %v2088
        %2108 = vmatprep.subr.bf16.mxu0 0
        %2109 = vmatpush1.bf16.msra.mxu0 %v2087
        %2110 = vmatprep.subr.bf16.mxu0 0
        %2111 = vmatpush2.bf16.msra.mxu0 0
        %2112 = vmatprep.subr.bf16.mxu0 0
        %2113 = vmatpush2.bf16.msra.mxu0 0
        %2114 = vmatprep.subr.bf16.mxu0 0
        %2115 = vmatpush2.bf16.msra.mxu0 0
        %2116 = vmatprep.subr.bf16.mxu0 0
        %2117 = vmatpush2.bf16.msra.mxu0 0
        %2118 = vmatprep.subr.bf16.mxu0 0
        %2119 = vmatpush2.bf16.msra.mxu0 0
        %2120 = vmatprep.subr.bf16.mxu0 0
        %2121 = vmatpush2.bf16.msra.mxu0 0
        %2122 = vmatprep.subr.bf16.mxu0 0
        %2123 = vmatpush2.bf16.msra.mxu0 0
        %2124 = vmatprep.subr.bf16.mxu0 0
        %2125 = vmatpush2.bf16.msra.mxu0 0
        %2126 = vmatprep.mubr.bf16.mxu0 0
        %2127 = vmatmul.mubr.bf16.gmra.mxu0 %v2092
        %v2128 = vpop.f32.mrf.mxu0
        %v2129 = vadd.f32 %v2077, %v2128
        %v2130 = vpop.f32.mrf.mxu0
        %v2131 = vpop.f32.mrf.mxu0
        %v2132 = vadd.f32 %v2077, %v2131
        %v2133 = vpop.f32.mrf.mxu0
        %2134 = vdwg.mxu0
        %v2135 = vmul.f32 %v2129, 0.5
        %v2136 = vmul.f32 %v2132, 0.5
        %v2137 = vmul.f32 %v2129, 0.70710677
        %v2138 = vmul.f32 %v2132, 0.70710677
        %v2139 = verf.f32.pop %v2137
        %v2140 = verf.f32.pop %v2138
        %v2141 = vadd.f32 %v2139, 1.0
        %v2142 = vadd.f32 %v2140, 1.0
        %v2143 = vmul.f32 %v2135, %v2141
        %v2144 = vmul.f32 %v2136, %v2142
        %v2145 = vpack.c.bf16 %v2144, %v2143
        %v2146 = vld [vmem:[%s760] sm:$0xf]
        %v2147 = vld [vmem:[%s760 + $0x4] sm:$0xf]
        %v2148 = vld [vmem:[%s760 + $0x8] sm:$0xf]
        %v2149 = vld [vmem:[%s760 + $0xc] sm:$0xf]
        %v2150 = vld [vmem:[%s760 + $0x10] sm:$0xf]
        %v2151 = vld [vmem:[%s760 + $0x14] sm:$0xf]
        %v2152 = vld [vmem:[%s760 + $0x18] sm:$0xf]
        %v2153 = vld [vmem:[%s760 + $0x1c] sm:$0xf]
        %v2154 = vld [vmem:[%s763] sm:$0x1]
        %v2156 = vlaneseq
        %v2157 = vshrl.u32 %v2156, 7
        %v2158 = vsub.s32 0, %v2157
        %v2159 = vrot.slane %v2154, %v2158
        %v2169 = vunpack.c.l.b16 %v2146
        %v2170 = vunpack.c.l.b16 %v2147
        %v2171 = vunpack.c.l.b16 %v2148
        %v2172 = vunpack.c.l.b16 %v2149
        %v2173 = vunpack.c.l.b16 %v2150
        %v2174 = vunpack.c.l.b16 %v2151
        %v2175 = vunpack.c.l.b16 %v2152
        %v2176 = vunpack.c.l.b16 %v2153
        %v2177 = vpack.c.b16 %v2170, %v2169
        %v2178 = vpack.c.b16 %v2172, %v2171
        %v2179 = vpack.c.b16 %v2174, %v2173
        %v2180 = vpack.c.b16 %v2176, %v2175
        %vm2185 = vcmask 523264
        %v2187 = vsel %vm2185, %v2145, 0
        %2189 = vmatprep.subr.bf16.mxu0 0
        %2190 = vmatpush1.bf16.msra.mxu0 0
        %2191 = vmatprep.subr.bf16.mxu0 0
        %2192 = vmatpush1.bf16.msra.mxu0 0
        %2193 = vmatprep.subr.bf16.mxu0 0
        %2194 = vmatpush1.bf16.msra.mxu0 0
        %2195 = vmatprep.subr.bf16.mxu0 0
        %2196 = vmatpush1.bf16.msra.mxu0 0
        %2197 = vmatprep.subr.bf16.mxu0 0
        %2198 = vmatpush1.bf16.msra.mxu0 %v2180
        %2199 = vmatprep.subr.bf16.mxu0 0
        %2200 = vmatpush1.bf16.msra.mxu0 %v2179
        %2201 = vmatprep.subr.bf16.mxu0 0
        %2202 = vmatpush1.bf16.msra.mxu0 %v2178
        %2203 = vmatprep.subr.bf16.mxu0 0
        %2204 = vmatpush1.bf16.msra.mxu0 %v2177
        %2205 = vmatprep.subr.bf16.mxu0 0
        %2206 = vmatpush2.bf16.msra.mxu0 0
        %2207 = vmatprep.subr.bf16.mxu0 0
        %2208 = vmatpush2.bf16.msra.mxu0 0
        %2209 = vmatprep.subr.bf16.mxu0 0
        %2210 = vmatpush2.bf16.msra.mxu0 0
        %2211 = vmatprep.subr.bf16.mxu0 0
        %2212 = vmatpush2.bf16.msra.mxu0 0
        %2213 = vmatprep.subr.bf16.mxu0 0
        %2214 = vmatpush2.bf16.msra.mxu0 0
        %2215 = vmatprep.subr.bf16.mxu0 0
        %2216 = vmatpush2.bf16.msra.mxu0 0
        %2217 = vmatprep.subr.bf16.mxu0 0
        %2218 = vmatpush2.bf16.msra.mxu0 0
        %2219 = vmatprep.subr.bf16.mxu0 0
        %2220 = vmatpush2.bf16.msra.mxu0 0
        %2221 = vmatprep.mubr.bf16.mxu0 0
        %2222 = vmatmul.mubr.bf16.gmra.mxu0 %v2187
        %v2223 = vpop.f32.mrf.mxu0
        %v2224 = vadd.f32 %v2159, %v2223
        %v2225 = vpop.f32.mrf.mxu0
        %v2226 = vpop.f32.mrf.mxu0
        %v2227 = vadd.f32 %v2159, %v2226
        %v2228 = vpop.f32.mrf.mxu0
        %2229 = vdwg.mxu0
        %v2230 = vadd.f32 %v2224, %v2065
        %v2231 = vadd.f32 %v2227, %v2066
        %v2232 = vld [vmem:[%s766] sm:$0x1]
        %v2233 = vld [vmem:[%s769] sm:$0x1]
        %v2234 = vsel %vm852, %v2230, 0.0
        %2235 = vadd.xlane.f32.xlu0 %v2234
        %v2236 = vpop.xlane.xlu0 %2235
        %v2237 = vsel %vm852, %v2231, 0.0
        %2238 = vadd.xlane.f32.xlu0 %v2237
        %v2239 = vpop.xlane.xlu0 %2238
        %v2240 = vmul.f32 %v2236, %v2030
        %v2241 = vmul.f32 %v2239, %v2030
        %v2242 = vsub.f32 %v2230, %v2240
        %v2243 = vsub.f32 %v2231, %v2241
        %v2244 = vmul.f32 %v2242, %v2242
        %v2245 = vmul.f32 %v2243, %v2243
        %v2246 = vsel %vm852, %v2244, 0.0
        %2247 = vadd.xlane.f32.xlu0 %v2246
        %v2248 = vpop.xlane.xlu0 %2247
        %v2249 = vsel %vm852, %v2245, 0.0
        %2250 = vadd.xlane.f32.xlu0 %v2249
        %v2251 = vpop.xlane.xlu0 %2250
        %v2252 = vmul.f32 %v2248, %v2030
        %v2253 = vmul.f32 %v2251, %v2030
        %v2254 = vadd.f32 %v2252, 1e-12
        %v2255 = vadd.f32 %v2253, 1e-12
        %v2256 = vrsqrt.pop %v2254
        %v2257 = vrsqrt.pop %v2255
        %v2258 = vmul.f32 %v2242, %v2256
        %v2259 = vmul.f32 %v2243, %v2257
        %v2261 = vlaneseq
        %v2262 = vshrl.u32 %v2261, 7
        %v2263 = vsub.s32 0, %v2262
        %v2264 = vrot.slane %v2232, %v2263
        %v2266 = vmul.f32 %v2258, %v2264
        %v2267 = vmul.f32 %v2259, %v2264
        %v2269 = vlaneseq
        %v2270 = vshrl.u32 %v2269, 7
        %v2271 = vsub.s32 0, %v2270
        %v2272 = vrot.slane %v2233, %v2271
        %v2274 = vadd.f32 %v2266, %v2272
        %v2275 = vadd.f32 %v2267, %v2272
        %2276 = vst.msk [vmem:[#allocation10] sm:$0xff] %vm852, %v2274
        %2277 = vst.msk [vmem:[#allocation10 + $0x8] sm:$0xff] %vm852, %v2275
        // Predicated region
        $region105: #{tpu_custom_call.1} parent=83 // pred_check
          %p2278 = pneg %p467
        $region106: #{tpu_custom_call.1} parent=83 // pred_check_branch
          %2280 = sbr.rel (%p2278) target = $region108
        $region107: #{tpu_custom_call.1} parent=83 // pred_region
          %s2281 = smul.u32 2, %s35
          %s2283 = ssub.s32 256, 256
          %2284 = vsyncadd [#allocation4], %s2283
          %s2285 = smul.addr %s2281, 128
          %s2286 = scalar_lea.hbm %s16, %s2285
          %s2287 = sshll.u32 [#allocation10], 4
          %s2288 = int_to_ptr.vmem [resolvable:$true] %s2287
          %2293 = dma.vmem_to_hbm [thread:$0]  %s2288, 256, %s2286, [#allocation4], 128, 128, 8
        $region108: #{tpu_custom_call.1} parent=83 // pred_fallthru
          _
        // Predicated region
        $region109: #{tpu_custom_call.1} parent=83 // pred_check
          %p2294 = pneg %p467
        $region110: #{tpu_custom_call.1} parent=83 // pred_check_branch
          %2296 = sbr.rel (%p2294) target = $region112
        $region111: #{tpu_custom_call.1} parent=83 // pred_region
          %2297 = dma.done [#allocation4], 256
        $region112: #{tpu_custom_call.1} parent=83 // pred_fallthru
          _
      $region84: #{tpu_custom_call.1} parent=5 // pred_fallthru
        _
      %p2298 = scmp.le.s32.totalorder 2, %s26
      // Predicated region
      $region113: #{tpu_custom_call.1} parent=5 // pred_check
        %p2299 = pneg %p2298
      $region114: #{tpu_custom_call.1} parent=5 // pred_check_branch
        %2301 = sbr.rel (%p2299) target = $region116
      $region115: #{tpu_custom_call.1} parent=5 // pred_region
        %s2302 = ssub.s32 %s26, 2
      $region116: #{tpu_custom_call.1} parent=5 // pred_fallthru
        _
    $region6: #{tpu_custom_call.1} parent=1 // loop_footer
      %s30 = sadd.s32 1, %s26
    $region7: #{tpu_custom_call.1} parent=1 // loop_footer_branch
      %25 = sbr.rel target = $region3
    $region8: #{tpu_custom_call.1} parent=1 // loop_exit
      _
    %2303 = vsyncpa [#allocation3], 1
    %s2304 = scalar_lea.sflag [#allocation3], 1
    %2305 = vsyncpa %s2304, 1
    %2306 = vsyncpa [#allocation6], 1
    %2307 = vsyncpa [#allocation9], 1
    %2308 = vsyncpa [#allocation4], 1
    %s2309 = scalar_lea.sflag [#allocation4], 1
    %2310 = vsyncpa %s2309, 1

</llo_original>
